<compile_context>
chip_gen: v5e
topology: v5e:2x2
jax: 0.10.0
libtpu: 0.0.40
codegen_flags: <defaults>
</compile_context>

<pallas_src>
import functools

import jax
import jax.numpy as jnp
from jax.experimental import pallas as pl
from jax.experimental.pallas import tpu as pltpu


# ----------------------------------------------------------------------------
# Fused CBAM kernel (one batch element per grid step, channel-major layout)
# ----------------------------------------------------------------------------
def cbam_kernel(x_ref, wst_ref, bs_ref, w1t_ref, b1_ref, w2t_ref, b2_ref,
                bmat_ref, o_ref):
    # x_ref:    (1, Cin, HW)   stem input, NCHW-native (HW lane-dense)
    # wst_ref:  (C, Cin)       stem 1x1 conv weight (pre-transposed), bs_ref: (C, 1)
    # w1t_ref:  (Cr, C)        CA fc1 (BN folded, pre-transposed),    b1_ref: (Cr, 1)
    # w2t_ref:  (C, Cr)        CA fc2 (BN folded, pre-transposed),    b2_ref: (C, 1)
    # bmat_ref: (2*HW, HW)     full spatial-conv matrix (zero padding folded in)
    # o_ref:    (1, C, HW)
    x = x_ref[0].astype(jnp.float32)                               # (Cin, HW)

    # ---- stem: 1x1 conv + bias -- one MXU matmul, output already channel-major ----
    xs = (jnp.dot(wst_ref[...], x, preferred_element_type=jnp.float32)
          + bs_ref[...])                                           # (C, HW)

    # ---- channel attention: global avg/max pool -> shared MLP -> sigmoid ----
    avg_c = jnp.mean(xs, axis=1, keepdims=True)                    # (C, 1)
    max_c = jnp.max(xs, axis=1, keepdims=True)                     # (C, 1)
    # pack avg|max as the two lane-columns of one tile -> fc1 ONCE, fc2 ONCE
    C = xs.shape[0]
    col = jax.lax.broadcasted_iota(jnp.int32, (C, 2), 1)
    pooled = jnp.where(col == 0, avg_c, max_c)                     # (C, 2)
    h = jnp.maximum(
        jnp.dot(w1t_ref[...], pooled, preferred_element_type=jnp.float32)
        + b1_ref[...], 0.0)                                        # (Cr, 2)  ReLU per path
    hsum = jnp.sum(h, axis=1, keepdims=True)                       # (Cr, 1) = relu(a)+relu(m)
    att = (jnp.dot(w2t_ref[...], hsum, preferred_element_type=jnp.float32)
           + 2.0 * b2_ref[...])                                    # = fc(avg) + fc(max)
    ca = 1.0 / (1.0 + jnp.exp(-att))                               # (C, 1), exact divide
    out = xs * ca                                                  # (C, HW), lane broadcast

    # Park the CA-reweighted tensor in the VMEM-resident output block now; it is
    # re-read for the final multiply so it need not stay live in vregs.
    o_ref[0] = out.astype(o_ref.dtype)

    # ---- spatial attention: the whole kxk conv is ONE matmul ----
    avg_s = jnp.mean(out, axis=0, keepdims=True)                   # (1, HW)
    max_s = jnp.max(out, axis=0, keepdims=True)                    # (1, HW)
    maps = jnp.concatenate([avg_s, max_s], axis=1)                 # (1, 2*HW), lane-aligned
    conv = jnp.dot(maps, bmat_ref[...],
                   preferred_element_type=jnp.float32)             # (1, HW)
    sa = pl.reciprocal(1.0 + jnp.exp(-conv), approx=True)          # sigmoid via EUP slot

    # sa is already in (1, HW) lane layout -> final multiply is a pure
    # sublane-broadcast on the VPU (no relayout in the epilogue).
    o_ref[0] = (o_ref[0] * sa).astype(o_ref.dtype)


# ----------------------------------------------------------------------------
# Parameter preprocessing (exact re-parameterizations)
# ----------------------------------------------------------------------------
def fold_bn(w, gamma, beta, mean, var, eps=1e-5):
    """Fold an inference-mode BatchNorm (following a bias-free 1x1 conv) into
    the conv weight (shape (..., C_out), C_out last) and a bias."""
    s = gamma / jnp.sqrt(var + eps)
    return w * s, beta - mean * s


def build_spatial_conv_matrix(w_sa, H, W, ksize):
    """Turn the (2, k, k) spatial-attention conv weight into a (2*H*W, H*W)
    matrix B with
        B[c*H*W + hi*W + wi, ho*W + wo] = w_sa[c, hi-ho+k//2, wi-wo+k//2]
    (zero outside the kernel support), so the kxk / pad=k//2 / 2->1-channel
    cross-correlation with zero padding becomes a single matmul of the flat
    (1, 2*H*W) [mean|max] row against B."""
    P = ksize // 2
    dy = jnp.arange(H)[:, None] - jnp.arange(H)[None, :] + P       # (H_in, H_out)
    dx = jnp.arange(W)[:, None] - jnp.arange(W)[None, :] + P       # (W_in, W_out)
    vy = (dy >= 0) & (dy < ksize)
    vx = (dx >= 0) & (dx < ksize)
    dyc = jnp.clip(dy, 0, ksize - 1)
    dxc = jnp.clip(dx, 0, ksize - 1)
    # taps[c, hi, wi, ho, wo] = w_sa[c, dy(hi,ho), dx(wi,wo)]
    taps = w_sa[:, dyc[:, None, :, None], dxc[None, :, None, :]]   # (2, H, W, H, W)
    mask = (vy[:, None, :, None] & vx[None, :, None, :])[None]     # (1, H, W, H, W)
    taps = jnp.where(mask, taps, 0.0)
    return taps.reshape(2 * H * W, H * W)


# ----------------------------------------------------------------------------
# Wrapper
# ----------------------------------------------------------------------------
@functools.partial(jax.jit, static_argnames=("ksize",))
def cbam_forward(x_nchw, params, *, ksize=7):
    """CBAM forward. Input NCHW, output NCHW (no layout transposes anywhere --
    only free reshapes around the pallas_call). BN layers in inference mode.
    For in_channels == out_channels the stem is the identity; passing an
    identity w_stem and zero b_stem is mathematically the same thing."""
    N, Cin, H, W = x_nchw.shape
    C = params["w_stem"].shape[1]
    Cr = params["w1"].shape[1]
    HW = H * W

    w1, b1 = fold_bn(params["w1"], params["bn1_g"], params["bn1_b"],
                     params["bn1_m"], params["bn1_v"])
    w2, b2 = fold_bn(params["w2"], params["bn2_g"], params["bn2_b"],
                     params["bn2_m"], params["bn2_v"])

    # Tiny weight transposes (channel-major orientation for the kernel).
    ws_t = params["w_stem"].T                                      # (C, Cin)
    w1_t = w1.T                                                    # (Cr, C)
    w2_t = w2.T                                                    # (C, Cr)
    bmat = build_spatial_conv_matrix(params["w_sa"], H, W, ksize)  # (2*HW, HW)

    x2 = x_nchw.reshape(N, Cin, HW)                                # free reshape of NCHW

    out = pl.pallas_call(
        cbam_kernel,
        out_shape=jax.ShapeDtypeStruct((N, C, HW), jnp.float32),
        grid=(N,),
        in_specs=[
            pl.BlockSpec((1, Cin, HW), lambda n: (n, 0, 0)),       # lane-dense input
            pl.BlockSpec((C, Cin), lambda n: (0, 0)),
            pl.BlockSpec((C, 1), lambda n: (0, 0)),
            pl.BlockSpec((Cr, C), lambda n: (0, 0)),
            pl.BlockSpec((Cr, 1), lambda n: (0, 0)),
            pl.BlockSpec((C, Cr), lambda n: (0, 0)),
            pl.BlockSpec((C, 1), lambda n: (0, 0)),
            pl.BlockSpec((2 * HW, HW), lambda n: (0, 0)),
        ],
        out_specs=pl.BlockSpec((1, C, HW), lambda n: (n, 0, 0)),   # lane-dense output
        compiler_params=pltpu.CompilerParams(
            dimension_semantics=("parallel",),
            vmem_limit_bytes=32 * 1024 * 1024),
    )(x2, ws_t, params["b_stem"].reshape(C, 1),
      w1_t, b1.reshape(Cr, 1), w2_t, b2.reshape(C, 1), bmat)

    return out.reshape(N, C, H, W)                                 # free reshape -> NCHW


# ----------------------------------------------------------------------------
# Plain-JAX reference (independent path, for a sanity check)
# ----------------------------------------------------------------------------
def cbam_reference(x_nchw, params, *, ksize=7):
    x = jnp.transpose(x_nchw, (0, 2, 3, 1))                        # NHWC
    N, H, W, Cin = x.shape
    P = ksize // 2

    xs = jnp.einsum("nhwc,cd->nhwd", x, params["w_stem"]) + params["b_stem"]

    w1, b1 = fold_bn(params["w1"], params["bn1_g"], params["bn1_b"],
                     params["bn1_m"], params["bn1_v"])
    w2, b2 = fold_bn(params["w2"], params["bn2_g"], params["bn2_b"],
                     params["bn2_m"], params["bn2_v"])

    def fc(v):                                                     # v: (N, C)
        return jnp.maximum(v @ w1 + b1, 0.0) @ w2 + b2

    ca = jax.nn.sigmoid(fc(jnp.mean(xs, axis=(1, 2))) + fc(jnp.max(xs, axis=(1, 2))))
    out = xs * ca[:, None, None, :]

    maps = jnp.stack([jnp.mean(out, axis=-1), jnp.max(out, axis=-1)], axis=-1)
    maps_p = jnp.pad(maps, ((0, 0), (P, P), (P, P), (0, 0)))
    w_sa = params["w_sa"]                                          # (2, k, k)
    acc = jnp.zeros((N, H, W), jnp.float32)
    for i in range(ksize):
        for j in range(ksize):
            acc = acc + (w_sa[0, i, j] * maps_p[:, i:i + H, j:j + W, 0]
                         + w_sa[1, i, j] * maps_p[:, i:i + H, j:j + W, 1])
    sa = jax.nn.sigmoid(acc)
    return jnp.transpose(out * sa[..., None], (0, 3, 1, 2))


# ----------------------------------------------------------------------------
# Deterministic synthetic parameters
# ----------------------------------------------------------------------------
def make_params(key, c_in, c_out, reduction=4, ksize=7):
    cr = c_out // reduction
    ks = jax.random.split(key, 10)
    return {
        # stem 1x1 conv (with bias), stored (C_in, C_out)
        "w_stem": jax.random.normal(ks[0], (c_in, c_out), jnp.float32) * 0.2,
        "b_stem": jax.random.normal(ks[1], (c_out,), jnp.float32) * 0.1,
        # ChannelAttention fc1 (bias-free conv) + BN1
        "w1": jax.random.normal(ks[2], (c_out, cr), jnp.float32) * 0.2,
        "bn1_g": 1.0 + 0.1 * jax.random.normal(ks[3], (cr,), jnp.float32),
        "bn1_b": 0.05 * jax.random.normal(ks[4], (cr,), jnp.float32),
        "bn1_m": 0.02 * jax.random.normal(ks[5], (cr,), jnp.float32),
        "bn1_v": jnp.ones((cr,), jnp.float32),
        # ChannelAttention fc2 (bias-free conv) + BN2
        "w2": jax.random.normal(ks[6], (cr, c_out), jnp.float32) * 0.2,
        "bn2_g": 1.0 + 0.1 * jax.random.normal(ks[7], (c_out,), jnp.float32),
        "bn2_b": 0.05 * jax.random.normal(ks[8], (c_out,), jnp.float32),
        "bn2_m": jnp.zeros((c_out,), jnp.float32),
        "bn2_v": jnp.ones((c_out,), jnp.float32),
        # SpatialAttention kxk conv, bias-free: channel 0 = mean map, 1 = max map
        "w_sa": jax.random.normal(ks[9], (2, ksize, ksize), jnp.float32) * 0.1,
    }


if __name__ == "__main__":
    # Small shapes consistent with the module: in=16 != out=128 (so the stem
    # 1x1 conv is exercised), reduction=4, kernel_size=7, 16x16 spatial.
    N, C_IN, C_OUT, H, W = 2, 16, 128, 16, 16
    REDUCTION, KSIZE = 4, 7

    key = jax.random.PRNGKey(0)
    kx, kp = jax.random.split(key)
    x = jax.random.normal(kx, (N, C_IN, H, W), jnp.float32)        # NCHW input
    params = make_params(kp, C_IN, C_OUT, reduction=REDUCTION, ksize=KSIZE)

    out = jax.block_until_ready(cbam_forward(x, params, ksize=KSIZE))
    ref = jax.block_until_ready(cbam_reference(x, params, ksize=KSIZE))

    assert out.shape == (N, C_OUT, H, W)
    err = float(jnp.max(jnp.abs(out - ref)))
    assert jnp.allclose(out, ref, atol=2e-3, rtol=2e-3), \
        f"mismatch vs reference (max abs err {err})"
    print("KERNEL_OK")
</pallas_src>

<mosaic_0001>
module attributes {stable_mosaic.version = 11 : i64} {
  func.func @cbam_kernel(%arg0: i32, %arg1: memref<1x16x256xf32, #tpu.memory_space<vmem>>, %arg2: memref<128x16xf32, #tpu.memory_space<vmem>>, %arg3: memref<128x1xf32, #tpu.memory_space<vmem>>, %arg4: memref<32x128xf32, #tpu.memory_space<vmem>>, %arg5: memref<32x1xf32, #tpu.memory_space<vmem>>, %arg6: memref<128x32xf32, #tpu.memory_space<vmem>>, %arg7: memref<128x1xf32, #tpu.memory_space<vmem>>, %arg8: memref<512x256xf32, #tpu.memory_space<vmem>>, %arg9: memref<1x128x256xf32, #tpu.memory_space<vmem>>) attributes {dimension_semantics = [#tpu.dimension_semantics<parallel>], iteration_bounds = array<i64: 2>, scalar_prefetch = 0 : i64, scratch_operands = 0 : i64, tpu.core_type = #tpu.core_type<tc>, window_params = [{transform_indices = @transform_0, window_bounds = array<i64: 1, 16, 256>}, {pipeline_mode = #tpu.pipeline_mode<synchronous>, transform_indices = @transform_1, window_bounds = array<i64: 128, 16>}, {pipeline_mode = #tpu.pipeline_mode<synchronous>, transform_indices = @transform_2, window_bounds = array<i64: 128, 1>}, {pipeline_mode = #tpu.pipeline_mode<synchronous>, transform_indices = @transform_3, window_bounds = array<i64: 32, 128>}, {pipeline_mode = #tpu.pipeline_mode<synchronous>, transform_indices = @transform_4, window_bounds = array<i64: 32, 1>}, {pipeline_mode = #tpu.pipeline_mode<synchronous>, transform_indices = @transform_5, window_bounds = array<i64: 128, 32>}, {pipeline_mode = #tpu.pipeline_mode<synchronous>, transform_indices = @transform_6, window_bounds = array<i64: 128, 1>}, {pipeline_mode = #tpu.pipeline_mode<synchronous>, transform_indices = @transform_7, window_bounds = array<i64: 512, 256>}, {transform_indices = @transform_8, window_bounds = array<i64: 1, 128, 256>}]} {
    %c0 = arith.constant 0 : index
    %c0_0 = arith.constant 0 : index
    %c0_1 = arith.constant 0 : index
    %0 = vector.load %arg1[%c0, %c0_0, %c0_1] : memref<1x16x256xf32, #tpu.memory_space<vmem>>, vector<1x16x256xf32>
    %1 = vector.shape_cast %0 : vector<1x16x256xf32> to vector<16x256xf32>
    %c0_2 = arith.constant 0 : index
    %c0_3 = arith.constant 0 : index
    %2 = vector.load %arg2[%c0_2, %c0_3] : memref<128x16xf32, #tpu.memory_space<vmem>>, vector<128x16xf32>
    %cst = arith.constant dense<0.000000e+00> : vector<128x256xf32>
    %3 = tpu.matmul %2, %1, %cst {dimension_numbers = #tpu.dot_dimension_numbers<[1], [0], [0], [1], [0, 0, 1, 1], [], []>} : vector<128x16xf32>, vector<16x256xf32>, vector<128x256xf32> -> vector<128x256xf32>
    %c0_4 = arith.constant 0 : index
    %c0_5 = arith.constant 0 : index
    %4 = vector.load %arg3[%c0_4, %c0_5] : memref<128x1xf32, #tpu.memory_space<vmem>>, vector<128x1xf32>
    %5 = vector.broadcast %4 : vector<128x1xf32> to vector<128x256xf32>
    %6 = arith.addf %3, %5 : vector<128x256xf32>
    %cst_6 = arith.constant dense<0.000000e+00> : vector<128xf32>
    %7 = vector.multi_reduction <add>, %6, %cst_6 [1] : vector<128x256xf32> to vector<128xf32>
    %8 = vector.shape_cast %7 : vector<128xf32> to vector<128x1xf32>
    %cst_7 = arith.constant 2.560000e+02 : f32
    %9 = vector.broadcast %cst_7 : f32 to vector<128x1xf32>
    %10 = arith.divf %8, %9 : vector<128x1xf32>
    %cst_8 = arith.constant dense<0xFF800000> : vector<128xf32>
    %11 = vector.multi_reduction <maximumf>, %6, %cst_8 [1] : vector<128x256xf32> to vector<128xf32>
    %12 = vector.shape_cast %11 : vector<128xf32> to vector<128x1xf32>
    %13 = tpu.iota {dimensions = array<i32: 1>} : vector<128x2xi32>
    %c0_i32 = arith.constant 0 : i32
    %14 = vector.broadcast %c0_i32 : i32 to vector<128x2xi32>
    %15 = arith.cmpi eq, %13, %14 : vector<128x2xi32>
    %16 = vector.shape_cast %10 : vector<128x1xf32> to vector<128x1xf32>
    %17 = vector.broadcast %16 : vector<128x1xf32> to vector<128x2xf32>
    %18 = vector.shape_cast %12 : vector<128x1xf32> to vector<128x1xf32>
    %19 = vector.broadcast %18 : vector<128x1xf32> to vector<128x2xf32>
    %20 = arith.select %15, %17, %19 : vector<128x2xi1>, vector<128x2xf32>
    %c0_9 = arith.constant 0 : index
    %c0_10 = arith.constant 0 : index
    %21 = vector.load %arg4[%c0_9, %c0_10] : memref<32x128xf32, #tpu.memory_space<vmem>>, vector<32x128xf32>
    %cst_11 = arith.constant dense<0.000000e+00> : vector<32x2xf32>
    %22 = tpu.matmul %21, %20, %cst_11 {dimension_numbers = #tpu.dot_dimension_numbers<[1], [0], [0], [1], [0, 0, 1, 1], [], []>} : vector<32x128xf32>, vector<128x2xf32>, vector<32x2xf32> -> vector<32x2xf32>
    %c0_12 = arith.constant 0 : index
    %c0_13 = arith.constant 0 : index
    %23 = vector.load %arg5[%c0_12, %c0_13] : memref<32x1xf32, #tpu.memory_space<vmem>>, vector<32x1xf32>
    %24 = vector.broadcast %23 : vector<32x1xf32> to vector<32x2xf32>
    %25 = arith.addf %22, %24 : vector<32x2xf32>
    %cst_14 = arith.constant 0.000000e+00 : f32
    %26 = vector.broadcast %cst_14 : f32 to vector<32x2xf32>
    %27 = arith.maximumf %25, %26 : vector<32x2xf32>
    %cst_15 = arith.constant dense<0.000000e+00> : vector<32xf32>
    %28 = vector.multi_reduction <add>, %27, %cst_15 [1] : vector<32x2xf32> to vector<32xf32>
    %29 = vector.shape_cast %28 : vector<32xf32> to vector<32x1xf32>
    %c0_16 = arith.constant 0 : index
    %c0_17 = arith.constant 0 : index
    %30 = vector.load %arg6[%c0_16, %c0_17] : memref<128x32xf32, #tpu.memory_space<vmem>>, vector<128x32xf32>
    %cst_18 = arith.constant dense<0.000000e+00> : vector<128x1xf32>
    %31 = tpu.matmul %30, %29, %cst_18 {dimension_numbers = #tpu.dot_dimension_numbers<[1], [0], [0], [1], [0, 0, 1, 1], [], []>} : vector<128x32xf32>, vector<32x1xf32>, vector<128x1xf32> -> vector<128x1xf32>
    %c0_19 = arith.constant 0 : index
    %c0_20 = arith.constant 0 : index
    %32 = vector.load %arg7[%c0_19, %c0_20] : memref<128x1xf32, #tpu.memory_space<vmem>>, vector<128x1xf32>
    %cst_21 = arith.constant 2.000000e+00 : f32
    %33 = vector.broadcast %cst_21 : f32 to vector<128x1xf32>
    %34 = arith.mulf %33, %32 : vector<128x1xf32>
    %35 = arith.addf %31, %34 : vector<128x1xf32>
    %cst_22 = arith.constant 0.000000e+00 : f32
    %36 = vector.broadcast %cst_22 : f32 to vector<128x1xf32>
    %37 = arith.subf %36, %35 : vector<128x1xf32>
    %38 = math.exp %37 : vector<128x1xf32>
    %cst_23 = arith.constant 1.000000e+00 : f32
    %39 = vector.broadcast %cst_23 : f32 to vector<128x1xf32>
    %40 = arith.addf %39, %38 : vector<128x1xf32>
    %cst_24 = arith.constant 1.000000e+00 : f32
    %41 = vector.broadcast %cst_24 : f32 to vector<128x1xf32>
    %42 = arith.divf %41, %40 : vector<128x1xf32>
    %43 = vector.broadcast %42 : vector<128x1xf32> to vector<128x256xf32>
    %44 = arith.mulf %6, %43 : vector<128x256xf32>
    %c0_25 = arith.constant 0 : index
    %c0_26 = arith.constant 0 : index
    %c0_27 = arith.constant 0 : index
    %45 = vector.load %arg9[%c0_25, %c0_26, %c0_27] : memref<1x128x256xf32, #tpu.memory_space<vmem>>, vector<1x128x256xf32>
    %46 = vector.shape_cast %45 : vector<1x128x256xf32> to vector<128x256xf32>
    %47 = vector.shape_cast %44 : vector<128x256xf32> to vector<1x128x256xf32>
    tpu.vector_store %arg9[%c0_25, %c0_26, %c0_27], %47 {strides = array<i32>} : memref<1x128x256xf32, #tpu.memory_space<vmem>>, vector<1x128x256xf32>,
    %cst_28 = arith.constant dense<0.000000e+00> : vector<256xf32>
    %48 = vector.multi_reduction <add>, %44, %cst_28 [0] : vector<128x256xf32> to vector<256xf32>
    %49 = vector.shape_cast %48 : vector<256xf32> to vector<1x256xf32>
    %cst_29 = arith.constant 1.280000e+02 : f32
    %50 = vector.broadcast %cst_29 : f32 to vector<1x256xf32>
    %51 = arith.divf %49, %50 : vector<1x256xf32>
    %cst_30 = arith.constant dense<0xFF800000> : vector<256xf32>
    %52 = vector.multi_reduction <maximumf>, %44, %cst_30 [0] : vector<128x256xf32> to vector<256xf32>
    %53 = vector.shape_cast %52 : vector<256xf32> to vector<1x256xf32>
    %54 = tpu.concatenate %51, %53 in 1 : vector<1x256xf32>, vector<1x256xf32> -> vector<1x512xf32>
    %c0_31 = arith.constant 0 : index
    %c0_32 = arith.constant 0 : index
    %55 = vector.load %arg8[%c0_31, %c0_32] : memref<512x256xf32, #tpu.memory_space<vmem>>, vector<512x256xf32>
    %cst_33 = arith.constant dense<0.000000e+00> : vector<1x256xf32>
    %56 = tpu.matmul %54, %55, %cst_33 {dimension_numbers = #tpu.dot_dimension_numbers<[1], [0], [0], [1], [0, 0, 1, 1], [], []>} : vector<1x512xf32>, vector<512x256xf32>, vector<1x256xf32> -> vector<1x256xf32>
    %cst_34 = arith.constant 0.000000e+00 : f32
    %57 = vector.broadcast %cst_34 : f32 to vector<1x256xf32>
    %58 = arith.subf %57, %56 : vector<1x256xf32>
    %59 = math.exp %58 : vector<1x256xf32>
    %cst_35 = arith.constant 1.000000e+00 : f32
    %60 = vector.broadcast %cst_35 : f32 to vector<1x256xf32>
    %61 = arith.addf %60, %59 : vector<1x256xf32>
    %62 = tpu.reciprocal %61 {approx = true} : vector<1x256xf32> -> vector<1x256xf32>
    %c0_36 = arith.constant 0 : index
    %c0_37 = arith.constant 0 : index
    %c0_38 = arith.constant 0 : index
    %63 = vector.load %arg9[%c0_36, %c0_37, %c0_38] : memref<1x128x256xf32, #tpu.memory_space<vmem>>, vector<1x128x256xf32>
    %64 = vector.shape_cast %63 : vector<1x128x256xf32> to vector<128x256xf32>
    %65 = vector.broadcast %62 : vector<1x256xf32> to vector<128x256xf32>
    %66 = arith.mulf %64, %65 : vector<128x256xf32>
    %c0_39 = arith.constant 0 : index
    %c0_40 = arith.constant 0 : index
    %c0_41 = arith.constant 0 : index
    %67 = vector.load %arg9[%c0_39, %c0_40, %c0_41] : memref<1x128x256xf32, #tpu.memory_space<vmem>>, vector<1x128x256xf32>
    %68 = vector.shape_cast %67 : vector<1x128x256xf32> to vector<128x256xf32>
    %69 = vector.shape_cast %66 : vector<128x256xf32> to vector<1x128x256xf32>
    tpu.vector_store %arg9[%c0_39, %c0_40, %c0_41], %69 {strides = array<i32>} : memref<1x128x256xf32, #tpu.memory_space<vmem>>, vector<1x128x256xf32>,
    return
  }
  func.func @transform_0(%arg0: i32) -> (i32, i32, i32) {
    %c0_i32 = arith.constant 0 : i32
    %c0_i32_0 = arith.constant 0 : i32
    %c0_i32_1 = arith.constant 0 : i32
    return %arg0, %c0_i32, %c0_i32_0 : i32, i32, i32
  }
  func.func @transform_1(%arg0: i32) -> (i32, i32) {
    %c0_i32 = arith.constant 0 : i32
    %c0_i32_0 = arith.constant 0 : i32
    %c0_i32_1 = arith.constant 0 : i32
    return %c0_i32, %c0_i32_0 : i32, i32
  }
  func.func @transform_2(%arg0: i32) -> (i32, i32) {
    %c0_i32 = arith.constant 0 : i32
    %c0_i32_0 = arith.constant 0 : i32
    %c0_i32_1 = arith.constant 0 : i32
    return %c0_i32, %c0_i32_0 : i32, i32
  }
  func.func @transform_3(%arg0: i32) -> (i32, i32) {
    %c0_i32 = arith.constant 0 : i32
    %c0_i32_0 = arith.constant 0 : i32
    %c0_i32_1 = arith.constant 0 : i32
    return %c0_i32, %c0_i32_0 : i32, i32
  }
  func.func @transform_4(%arg0: i32) -> (i32, i32) {
    %c0_i32 = arith.constant 0 : i32
    %c0_i32_0 = arith.constant 0 : i32
    %c0_i32_1 = arith.constant 0 : i32
    return %c0_i32, %c0_i32_0 : i32, i32
  }
  func.func @transform_5(%arg0: i32) -> (i32, i32) {
    %c0_i32 = arith.constant 0 : i32
    %c0_i32_0 = arith.constant 0 : i32
    %c0_i32_1 = arith.constant 0 : i32
    return %c0_i32, %c0_i32_0 : i32, i32
  }
  func.func @transform_6(%arg0: i32) -> (i32, i32) {
    %c0_i32 = arith.constant 0 : i32
    %c0_i32_0 = arith.constant 0 : i32
    %c0_i32_1 = arith.constant 0 : i32
    return %c0_i32, %c0_i32_0 : i32, i32
  }
  func.func @transform_7(%arg0: i32) -> (i32, i32) {
    %c0_i32 = arith.constant 0 : i32
    %c0_i32_0 = arith.constant 0 : i32
    %c0_i32_1 = arith.constant 0 : i32
    return %c0_i32, %c0_i32_0 : i32, i32
  }
  func.func @transform_8(%arg0: i32) -> (i32, i32, i32) {
    %c0_i32 = arith.constant 0 : i32
    %c0_i32_0 = arith.constant 0 : i32
    %c0_i32_1 = arith.constant 0 : i32
    return %arg0, %c0_i32, %c0_i32_0 : i32, i32, i32
  }
}

</mosaic_0001>

<llo_original>
// kernel: cbam_forward.1
$region0: #{cbam_forward.1}
  #allocation0 [shape = 'u32[]', space=smem, size = 0x4, offset = 0x4, fixed_abs, tag = 'smem constant byte address 0x4 - core index']
  #allocation1 [shape = 'u32[72,128]{1,0:T(1,128)}', space=vmem, size = 0x9000, scoped, tag = 'internal scratch']
  %s0 = inlined_call_operand.vmem [shape: f32[2,16,256], index: 0, kind: input, shape index: {}]
  %s1 = inlined_call_operand.vmem [shape: f32[128,16], index: 1, kind: input, shape index: {}]
  %s2 = inlined_call_operand.vmem [shape: f32[128,1], index: 2, kind: input, shape index: {}]
  %s3 = inlined_call_operand.vmem [shape: f32[32,128], index: 3, kind: input, shape index: {}]
  %s4 = inlined_call_operand.vmem [shape: f32[32,1], index: 4, kind: input, shape index: {}]
  %s5 = inlined_call_operand.vmem [shape: f32[128,32], index: 5, kind: input, shape index: {}]
  %s6 = inlined_call_operand.vmem [shape: f32[128,1], index: 6, kind: input, shape index: {}]
  %s7 = inlined_call_operand.vmem [shape: f32[512,256], index: 7, kind: input, shape index: {}]
  %s8 = inlined_call_operand.vmem [shape: f32[2,128,256], index: 8, kind: output, shape index: {}]
  %s9 = sld [smem:[#allocation0]]
  $region65: #{cbam_forward.1} parent=0
    _
  %s11 = ssub.s32 1, %s9
  %s12 = scalar_select 0, %s11, %s9
  loop: start=0, step=1, limit=4
  $region2: #{cbam_forward.1} parent=0 // loop_pre_header
    _
  $region3: #{cbam_forward.1} parent=0 // loop_header
    %s14 = sphi 0, %s18
    %p15 = scmp.ge.s32.totalorder %s14, 4
    %s24 = sphi 0, %s26
    %s27 = sphi 0, %s24
    %s28 = sphi 0, %s27
    %s44 = sphi 0, %s28
    %s48 = sphi 0, %s48
    %s50 = sphi 0, %s48
    %s51 = sphi 0, %s50
    %s65 = sphi 0, %s51
    %s69 = sphi 0, %s69
    %s71 = sphi 0, %s69
    %s72 = sphi 0, %s71
    %s86 = sphi 0, %s72
    %s90 = sphi 0, %s90
    %s92 = sphi 0, %s90
    %s93 = sphi 0, %s92
    %s107 = sphi 0, %s93
    %s111 = sphi 0, %s111
    %s113 = sphi 0, %s111
    %s114 = sphi 0, %s113
    %s128 = sphi 0, %s114
    %s132 = sphi 0, %s132
    %s134 = sphi 0, %s132
    %s135 = sphi 0, %s134
    %s149 = sphi 0, %s135
    %s153 = sphi 0, %s153
    %s155 = sphi 0, %s153
    %s156 = sphi 0, %s155
    %s170 = sphi 0, %s156
    %s174 = sphi 0, %s174
    %s176 = sphi 0, %s174
    %s177 = sphi 0, %s176
    %s191 = sphi 0, %s177
    %s197 = sphi 0, %s199
    %s200 = sphi 0, %s197
    %s201 = sphi 0, %s200
    %s217 = sphi 0, %s201
  $region4: #{cbam_forward.1} parent=0 // loop_header_branch
    %17 = sbr.rel (%p15) target = $region8
  $region5: #{cbam_forward.1} parent=0 // loop_body
    %s19 = ssub.s32 %s14, 1
    %s20 = ssub.s32 %s14, 2
    %s21 = sadd.s32 %s14, 1
    %s22 = ssub.s32 %s14, %s21
    %p23 = scmp.eq.s32.totalorder %s22, 0
    %s25 = sadd.s32 %s24, 1
    %s26 = scalar_select %p23, %s24, %s25
    %p29 = pneg %p23
    %p30 = scmp.eq.s32.totalorder %s14, 1
    %p31 = por %p29, %p30
    %p32 = scmp.ne.s32.totalorder %s24, %s27
    %p33 = scmp.eq.s32.totalorder %s14, 0
    %p34 = por %p32, %p33
    %p35 = scmp.ne.s32.totalorder %s24, %s27
    %p36 = scmp.eq.s32.totalorder %s19, 1
    %p37 = por %p35, %p36
    %p38 = scmp.ne.s32.totalorder %s27, %s28
    %p39 = scmp.eq.s32.totalorder %s19, 0
    %p40 = por %p38, %p39
    %p41 = scmp.ne.s32.totalorder %s27, %s28
    %p42 = scmp.eq.s32.totalorder %s20, 1
    %p43 = por %p41, %p42
    %p45 = scmp.ne.s32.totalorder %s28, %s44
    %p46 = scmp.eq.s32.totalorder %s20, 0
    %p47 = por %p45, %p46
    %s49 = sadd.s32 %s48, 1
    %p52 = scmp.eq.s32.totalorder %s14, 1
    %p53 = scmp.ne.s32.totalorder %s48, %s50
    %p54 = scmp.eq.s32.totalorder %s14, 0
    %p55 = por %p53, %p54
    %p56 = scmp.ne.s32.totalorder %s48, %s50
    %p57 = scmp.eq.s32.totalorder %s19, 1
    %p58 = por %p56, %p57
    %p59 = scmp.ne.s32.totalorder %s50, %s51
    %p60 = scmp.eq.s32.totalorder %s19, 0
    %p61 = por %p59, %p60
    %p62 = scmp.ne.s32.totalorder %s50, %s51
    %p63 = scmp.eq.s32.totalorder %s20, 1
    %p64 = por %p62, %p63
    %p66 = scmp.ne.s32.totalorder %s51, %s65
    %p67 = scmp.eq.s32.totalorder %s20, 0
    %p68 = por %p66, %p67
    %s70 = sadd.s32 %s69, 1
    %p73 = scmp.eq.s32.totalorder %s14, 1
    %p74 = scmp.ne.s32.totalorder %s69, %s71
    %p75 = scmp.eq.s32.totalorder %s14, 0
    %p76 = por %p74, %p75
    %p77 = scmp.ne.s32.totalorder %s69, %s71
    %p78 = scmp.eq.s32.totalorder %s19, 1
    %p79 = por %p77, %p78
    %p80 = scmp.ne.s32.totalorder %s71, %s72
    %p81 = scmp.eq.s32.totalorder %s19, 0
    %p82 = por %p80, %p81
    %p83 = scmp.ne.s32.totalorder %s71, %s72
    %p84 = scmp.eq.s32.totalorder %s20, 1
    %p85 = por %p83, %p84
    %p87 = scmp.ne.s32.totalorder %s72, %s86
    %p88 = scmp.eq.s32.totalorder %s20, 0
    %p89 = por %p87, %p88
    %s91 = sadd.s32 %s90, 1
    %p94 = scmp.eq.s32.totalorder %s14, 1
    %p95 = scmp.ne.s32.totalorder %s90, %s92
    %p96 = scmp.eq.s32.totalorder %s14, 0
    %p97 = por %p95, %p96
    %p98 = scmp.ne.s32.totalorder %s90, %s92
    %p99 = scmp.eq.s32.totalorder %s19, 1
    %p100 = por %p98, %p99
    %p101 = scmp.ne.s32.totalorder %s92, %s93
    %p102 = scmp.eq.s32.totalorder %s19, 0
    %p103 = por %p101, %p102
    %p104 = scmp.ne.s32.totalorder %s92, %s93
    %p105 = scmp.eq.s32.totalorder %s20, 1
    %p106 = por %p104, %p105
    %p108 = scmp.ne.s32.totalorder %s93, %s107
    %p109 = scmp.eq.s32.totalorder %s20, 0
    %p110 = por %p108, %p109
    %s112 = sadd.s32 %s111, 1
    %p115 = scmp.eq.s32.totalorder %s14, 1
    %p116 = scmp.ne.s32.totalorder %s111, %s113
    %p117 = scmp.eq.s32.totalorder %s14, 0
    %p118 = por %p116, %p117
    %p119 = scmp.ne.s32.totalorder %s111, %s113
    %p120 = scmp.eq.s32.totalorder %s19, 1
    %p121 = por %p119, %p120
    %p122 = scmp.ne.s32.totalorder %s113, %s114
    %p123 = scmp.eq.s32.totalorder %s19, 0
    %p124 = por %p122, %p123
    %p125 = scmp.ne.s32.totalorder %s113, %s114
    %p126 = scmp.eq.s32.totalorder %s20, 1
    %p127 = por %p125, %p126
    %p129 = scmp.ne.s32.totalorder %s114, %s128
    %p130 = scmp.eq.s32.totalorder %s20, 0
    %p131 = por %p129, %p130
    %s133 = sadd.s32 %s132, 1
    %p136 = scmp.eq.s32.totalorder %s14, 1
    %p137 = scmp.ne.s32.totalorder %s132, %s134
    %p138 = scmp.eq.s32.totalorder %s14, 0
    %p139 = por %p137, %p138
    %p140 = scmp.ne.s32.totalorder %s132, %s134
    %p141 = scmp.eq.s32.totalorder %s19, 1
    %p142 = por %p140, %p141
    %p143 = scmp.ne.s32.totalorder %s134, %s135
    %p144 = scmp.eq.s32.totalorder %s19, 0
    %p145 = por %p143, %p144
    %p146 = scmp.ne.s32.totalorder %s134, %s135
    %p147 = scmp.eq.s32.totalorder %s20, 1
    %p148 = por %p146, %p147
    %p150 = scmp.ne.s32.totalorder %s135, %s149
    %p151 = scmp.eq.s32.totalorder %s20, 0
    %p152 = por %p150, %p151
    %s154 = sadd.s32 %s153, 1
    %p157 = scmp.eq.s32.totalorder %s14, 1
    %p158 = scmp.ne.s32.totalorder %s153, %s155
    %p159 = scmp.eq.s32.totalorder %s14, 0
    %p160 = por %p158, %p159
    %p161 = scmp.ne.s32.totalorder %s153, %s155
    %p162 = scmp.eq.s32.totalorder %s19, 1
    %p163 = por %p161, %p162
    %p164 = scmp.ne.s32.totalorder %s155, %s156
    %p165 = scmp.eq.s32.totalorder %s19, 0
    %p166 = por %p164, %p165
    %p167 = scmp.ne.s32.totalorder %s155, %s156
    %p168 = scmp.eq.s32.totalorder %s20, 1
    %p169 = por %p167, %p168
    %p171 = scmp.ne.s32.totalorder %s156, %s170
    %p172 = scmp.eq.s32.totalorder %s20, 0
    %p173 = por %p171, %p172
    %s175 = sadd.s32 %s174, 1
    %p178 = scmp.eq.s32.totalorder %s14, 1
    %p179 = scmp.ne.s32.totalorder %s174, %s176
    %p180 = scmp.eq.s32.totalorder %s14, 0
    %p181 = por %p179, %p180
    %p182 = scmp.ne.s32.totalorder %s174, %s176
    %p183 = scmp.eq.s32.totalorder %s19, 1
    %p184 = por %p182, %p183
    %p185 = scmp.ne.s32.totalorder %s176, %s177
    %p186 = scmp.eq.s32.totalorder %s19, 0
    %p187 = por %p185, %p186
    %p188 = scmp.ne.s32.totalorder %s176, %s177
    %p189 = scmp.eq.s32.totalorder %s20, 1
    %p190 = por %p188, %p189
    %p192 = scmp.ne.s32.totalorder %s177, %s191
    %p193 = scmp.eq.s32.totalorder %s20, 0
    %p194 = por %p192, %p193
    %s195 = ssub.s32 %s14, %s21
    %p196 = scmp.eq.s32.totalorder %s195, 0
    %s198 = sadd.s32 %s197, 1
    %s199 = scalar_select %p196, %s197, %s198
    %p202 = pneg %p196
    %p203 = scmp.eq.s32.totalorder %s14, 1
    %p204 = por %p202, %p203
    %p205 = scmp.ne.s32.totalorder %s197, %s200
    %p206 = scmp.eq.s32.totalorder %s14, 0
    %p207 = por %p205, %p206
    %p208 = scmp.ne.s32.totalorder %s197, %s200
    %p209 = scmp.eq.s32.totalorder %s19, 1
    %p210 = por %p208, %p209
    %p211 = scmp.ne.s32.totalorder %s200, %s201
    %p212 = scmp.eq.s32.totalorder %s19, 0
    %p213 = por %p211, %p212
    %p214 = scmp.ne.s32.totalorder %s200, %s201
    %p215 = scmp.eq.s32.totalorder %s20, 1
    %p216 = por %p214, %p215
    %p218 = scmp.ne.s32.totalorder %s201, %s217
    %p219 = scmp.eq.s32.totalorder %s20, 0
    %p220 = por %p218, %p219
    %p221 = scmp.le.s32.totalorder 1, %s14
    %p222 = scmp.lt.s32.totalorder %s14, 3
    %p223 = pnand %p221, %p222
    %p224 = pneg %p223
    // Predicated region
    $region9: #{cbam_forward.1} parent=5 // pred_check
      _
    $region10: #{cbam_forward.1} parent=5 // pred_check_branch
      %226 = sbr.rel (%p223) target = $region12
    $region11: #{cbam_forward.1} parent=5 // pred_region
      %s227 = ssub.s32 %s14, 1
      // Predicated region
      $region13: #{cbam_forward.1} parent=11 // pred_check
        %p228 = pneg %p61
      $region14: #{cbam_forward.1} parent=11 // pred_check_branch
        %230 = sbr.rel (%p228) target = $region16
      $region15: #{cbam_forward.1} parent=11 // pred_region
        _
      $region16: #{cbam_forward.1} parent=11 // pred_fallthru
        _
      // Predicated region
      $region17: #{cbam_forward.1} parent=11 // pred_check
        %p231 = pneg %p82
      $region18: #{cbam_forward.1} parent=11 // pred_check_branch
        %233 = sbr.rel (%p231) target = $region20
      $region19: #{cbam_forward.1} parent=11 // pred_region
        _
      $region20: #{cbam_forward.1} parent=11 // pred_fallthru
        _
      // Predicated region
      $region21: #{cbam_forward.1} parent=11 // pred_check
        %p234 = pneg %p103
      $region22: #{cbam_forward.1} parent=11 // pred_check_branch
        %236 = sbr.rel (%p234) target = $region24
      $region23: #{cbam_forward.1} parent=11 // pred_region
        _
      $region24: #{cbam_forward.1} parent=11 // pred_fallthru
        _
      // Predicated region
      $region25: #{cbam_forward.1} parent=11 // pred_check
        %p237 = pneg %p124
      $region26: #{cbam_forward.1} parent=11 // pred_check_branch
        %239 = sbr.rel (%p237) target = $region28
      $region27: #{cbam_forward.1} parent=11 // pred_region
        _
      $region28: #{cbam_forward.1} parent=11 // pred_fallthru
        _
      // Predicated region
      $region29: #{cbam_forward.1} parent=11 // pred_check
        %p240 = pneg %p145
      $region30: #{cbam_forward.1} parent=11 // pred_check_branch
        %242 = sbr.rel (%p240) target = $region32
      $region31: #{cbam_forward.1} parent=11 // pred_region
        _
      $region32: #{cbam_forward.1} parent=11 // pred_fallthru
        _
      // Predicated region
      $region33: #{cbam_forward.1} parent=11 // pred_check
        %p243 = pneg %p166
      $region34: #{cbam_forward.1} parent=11 // pred_check_branch
        %245 = sbr.rel (%p243) target = $region36
      $region35: #{cbam_forward.1} parent=11 // pred_region
        _
      $region36: #{cbam_forward.1} parent=11 // pred_fallthru
        _
      // Predicated region
      $region37: #{cbam_forward.1} parent=11 // pred_check
        %p246 = pneg %p187
      $region38: #{cbam_forward.1} parent=11 // pred_check_branch
        %248 = sbr.rel (%p246) target = $region40
      $region39: #{cbam_forward.1} parent=11 // pred_region
        _
      $region40: #{cbam_forward.1} parent=11 // pred_fallthru
        _
    $region12: #{cbam_forward.1} parent=5 // pred_fallthru
      _
    %p249 = scmp.lt.s32.totalorder %s14, 2
    // Predicated region
    $region41: #{cbam_forward.1} parent=5 // pred_check
      %p250 = pneg %p249
    $region42: #{cbam_forward.1} parent=5 // pred_check_branch
      %252 = sbr.rel (%p250) target = $region44
    $region43: #{cbam_forward.1} parent=5 // pred_region
      // Predicated region
      $region45: #{cbam_forward.1} parent=43 // pred_check
        %p253 = pneg %p34
      $region46: #{cbam_forward.1} parent=43 // pred_check_branch
        %255 = sbr.rel (%p253) target = $region48
      $region47: #{cbam_forward.1} parent=43 // pred_region
        %p256 = scmp.lt.s32.totalorder %s14, 1
        %s257 = scalar_select %p256, %s14, 1
        %s258 = smul.addr %s257, 4
        %s259 = smul.addr %s258, 8
        %s260 = scalar_lea.vmem %s0, %s259
      $region48: #{cbam_forward.1} parent=43 // pred_fallthru
        _
    $region44: #{cbam_forward.1} parent=5 // pred_fallthru
      _
    %p261 = scmp.le.s32.totalorder 1, %s14
    %p262 = scmp.lt.s32.totalorder %s14, 3
    %p263 = pnand %p261, %p262
    %p264 = pneg %p263
    // Predicated region
    $region49: #{cbam_forward.1} parent=5 // pred_check
      _
    $region50: #{cbam_forward.1} parent=5 // pred_check_branch
      %266 = sbr.rel (%p263) target = $region52
    $region51: #{cbam_forward.1} parent=5 // pred_region
      %s267 = ssub.s32 %s14, 1
      %p268 = scmp.lt.s32.totalorder %s19, 1
      %s269 = scalar_select %p268, %s19, 1
      %s270 = smul.addr %s269, 4
      %s271 = smul.addr %s270, 8
      %s272 = scalar_lea.vmem %s0, %s271
      %p273 = pneg %p40
      %p274 = pneg %p37
      %p275 = pneg %p61
      %p276 = pneg %p58
      %p277 = pneg %p82
      %p278 = pneg %p79
      %p279 = pneg %p103
      %p280 = pneg %p100
      %p281 = pneg %p124
      %p282 = pneg %p121
      %p283 = pneg %p145
      %p284 = pneg %p142
      %p285 = pneg %p166
      %p286 = pneg %p163
      %p287 = pneg %p187
      %p288 = pneg %p184
      %p289 = pneg %p213
      %p290 = pneg %p210
      %p291 = scmp.lt.s32.totalorder %s19, 1
      %s292 = scalar_select %p291, %s19, 1
      %s293 = smul.addr %s292, 32
      %s294 = smul.addr %s293, 8
      %s295 = scalar_lea.vmem %s8, %s294
      %p296 = scmp.lt.s32.totalorder %s19, 1
      %s297 = scalar_select %p296, %s19, 1
      %s298 = smul.addr %s297, 4
      %s299 = smul.addr %s298, 8
      %s300 = scalar_lea.vmem %s0, %s299
      %p301 = scmp.lt.s32.totalorder %s19, 1
      %s302 = scalar_select %p301, %s19, 1
      %s303 = smul.addr %s302, 32
      %s304 = smul.addr %s303, 8
      %s305 = scalar_lea.vmem %s8, %s304
      %v306 = vld [vmem:[%s300] sm:$0xff]
      %v307 = vld [vmem:[%s300 + $0x8] sm:$0xff]
      %v308 = vld [vmem:[%s300 + $0x10] sm:$0xff]
      %v309 = vld [vmem:[%s300 + $0x18] sm:$0xff]
      %v310 = vld [vmem:[%s1] sm:$0xff]
      %v311 = vld [vmem:[%s1 + $0x8] sm:$0xff]
      %v312 = vld [vmem:[%s1 + $0x10] sm:$0xff]
      %v313 = vld [vmem:[%s1 + $0x18] sm:$0xff]
      %v314 = vld [vmem:[%s1 + $0x20] sm:$0xff]
      %v315 = vld [vmem:[%s1 + $0x28] sm:$0xff]
      %v316 = vld [vmem:[%s1 + $0x30] sm:$0xff]
      %v317 = vld [vmem:[%s1 + $0x38] sm:$0xff]
      %v318 = vld [vmem:[%s1 + $0x40] sm:$0xff]
      %v319 = vld [vmem:[%s1 + $0x48] sm:$0xff]
      %v320 = vld [vmem:[%s1 + $0x50] sm:$0xff]
      %v321 = vld [vmem:[%s1 + $0x58] sm:$0xff]
      %v322 = vld [vmem:[%s1 + $0x60] sm:$0xff]
      %v323 = vld [vmem:[%s1 + $0x68] sm:$0xff]
      %v324 = vld [vmem:[%s1 + $0x70] sm:$0xff]
      %v325 = vld [vmem:[%s1 + $0x78] sm:$0xff]
      %v326 = vld [vmem:[%s2] sm:$0xff]
      %v327 = vld [vmem:[%s2 + $0x8] sm:$0xff]
      %v328 = vld [vmem:[%s2 + $0x10] sm:$0xff]
      %v329 = vld [vmem:[%s2 + $0x18] sm:$0xff]
      %v330 = vld [vmem:[%s2 + $0x20] sm:$0xff]
      %v331 = vld [vmem:[%s2 + $0x28] sm:$0xff]
      %v332 = vld [vmem:[%s2 + $0x30] sm:$0xff]
      %v333 = vld [vmem:[%s2 + $0x38] sm:$0xff]
      %v334 = vld [vmem:[%s2 + $0x40] sm:$0xff]
      %v335 = vld [vmem:[%s2 + $0x48] sm:$0xff]
      %v336 = vld [vmem:[%s2 + $0x50] sm:$0xff]
      %v337 = vld [vmem:[%s2 + $0x58] sm:$0xff]
      %v338 = vld [vmem:[%s2 + $0x60] sm:$0xff]
      %v339 = vld [vmem:[%s2 + $0x68] sm:$0xff]
      %v340 = vld [vmem:[%s2 + $0x70] sm:$0xff]
      %v341 = vld [vmem:[%s2 + $0x78] sm:$0xff]
      %343 = vset.pattern.permute.xlu0 0
      %344 = vperm.xlu0 %343, %v326
      %v345 = vpop.permute.xlu0 %344
      %348 = vset.pattern.permute.xlu0 0
      %349 = vperm.xlu0 %348, %v327
      %v350 = vpop.permute.xlu0 %349
      %353 = vset.pattern.permute.xlu0 0
      %354 = vperm.xlu0 %353, %v328
      %v355 = vpop.permute.xlu0 %354
      %358 = vset.pattern.permute.xlu0 0
      %359 = vperm.xlu0 %358, %v329
      %v360 = vpop.permute.xlu0 %359
      %363 = vset.pattern.permute.xlu0 0
      %364 = vperm.xlu0 %363, %v330
      %v365 = vpop.permute.xlu0 %364
      %368 = vset.pattern.permute.xlu0 0
      %369 = vperm.xlu0 %368, %v331
      %v370 = vpop.permute.xlu0 %369
      %373 = vset.pattern.permute.xlu0 0
      %374 = vperm.xlu0 %373, %v332
      %v375 = vpop.permute.xlu0 %374
      %378 = vset.pattern.permute.xlu0 0
      %379 = vperm.xlu0 %378, %v333
      %v380 = vpop.permute.xlu0 %379
      %383 = vset.pattern.permute.xlu0 0
      %384 = vperm.xlu0 %383, %v334
      %v385 = vpop.permute.xlu0 %384
      %388 = vset.pattern.permute.xlu0 0
      %389 = vperm.xlu0 %388, %v335
      %v390 = vpop.permute.xlu0 %389
      %393 = vset.pattern.permute.xlu0 0
      %394 = vperm.xlu0 %393, %v336
      %v395 = vpop.permute.xlu0 %394
      %398 = vset.pattern.permute.xlu0 0
      %399 = vperm.xlu0 %398, %v337
      %v400 = vpop.permute.xlu0 %399
      %403 = vset.pattern.permute.xlu0 0
      %404 = vperm.xlu0 %403, %v338
      %v405 = vpop.permute.xlu0 %404
      %408 = vset.pattern.permute.xlu0 0
      %409 = vperm.xlu0 %408, %v339
      %v410 = vpop.permute.xlu0 %409
      %413 = vset.pattern.permute.xlu0 0
      %414 = vperm.xlu0 %413, %v340
      %v415 = vpop.permute.xlu0 %414
      %418 = vset.pattern.permute.xlu0 0
      %419 = vperm.xlu0 %418, %v341
      %v420 = vpop.permute.xlu0 %419
      %vm422 = vcmask 130048
      %v424 = vsel %vm422, %v310, 0
      %v427 = vsel %vm422, %v311, 0
      %v430 = vsel %vm422, %v312, 0
      %v433 = vsel %vm422, %v313, 0
      %v436 = vsel %vm422, %v314, 0
      %v439 = vsel %vm422, %v315, 0
      %v442 = vsel %vm422, %v316, 0
      %v445 = vsel %vm422, %v317, 0
      %v448 = vsel %vm422, %v318, 0
      %v451 = vsel %vm422, %v319, 0
      %v454 = vsel %vm422, %v320, 0
      %v457 = vsel %vm422, %v321, 0
      %v460 = vsel %vm422, %v322, 0
      %v463 = vsel %vm422, %v323, 0
      %v466 = vsel %vm422, %v324, 0
      %v469 = vsel %vm422, %v325, 0
      %471 = vmatpush.msra.mxu0 0.0
      %472 = vmatpush.msra.mxu0 0.0
      %473 = vmatpush.msra.mxu0 0.0
      %474 = vmatpush.msra.mxu0 0.0
      %475 = vmatpush.msra.mxu0 0.0
      %476 = vmatpush.msra.mxu0 0.0
      %477 = vmatpush.msra.mxu0 0.0
      %478 = vmatpush.msra.mxu0 0.0
      %479 = vmatpush.msra.mxu0 0.0
      %480 = vmatpush.msra.mxu0 0.0
      %481 = vmatpush.msra.mxu0 0.0
      %482 = vmatpush.msra.mxu0 0.0
      %483 = vmatpush.msra.mxu0 0.0
      %484 = vmatpush.msra.mxu0 0.0
      %485 = vmatpush.msra.mxu0 %v308
      %486 = vmatpush.msra.mxu0 %v306
      %487 = vmatmul.f32.gmra.mxu0 %v424
      %v488 = vpop.f32.mrf.mxu0
      %v489 = vadd.f32 %v345, %v488
      %490 = vmatmul.f32.gmra.mxu0 %v427
      %v491 = vpop.f32.mrf.mxu0
      %v492 = vadd.f32 %v350, %v491
      %493 = vmatmul.f32.gmra.mxu0 %v430
      %v494 = vpop.f32.mrf.mxu0
      %v495 = vadd.f32 %v355, %v494
      %496 = vmatmul.f32.gmra.mxu0 %v433
      %v497 = vpop.f32.mrf.mxu0
      %v498 = vadd.f32 %v360, %v497
      %499 = vmatmul.f32.gmra.mxu0 %v436
      %v500 = vpop.f32.mrf.mxu0
      %v501 = vadd.f32 %v365, %v500
      %502 = vmatmul.f32.gmra.mxu0 %v439
      %v503 = vpop.f32.mrf.mxu0
      %v504 = vadd.f32 %v370, %v503
      %505 = vmatmul.f32.gmra.mxu0 %v442
      %v506 = vpop.f32.mrf.mxu0
      %v507 = vadd.f32 %v375, %v506
      %508 = vmatmul.f32.gmra.mxu0 %v445
      %v509 = vpop.f32.mrf.mxu0
      %v510 = vadd.f32 %v380, %v509
      %511 = vmatmul.f32.gmra.mxu0 %v448
      %v512 = vpop.f32.mrf.mxu0
      %v513 = vadd.f32 %v385, %v512
      %514 = vmatmul.f32.gmra.mxu0 %v451
      %v515 = vpop.f32.mrf.mxu0
      %v516 = vadd.f32 %v390, %v515
      %517 = vmatmul.f32.gmra.mxu0 %v454
      %v518 = vpop.f32.mrf.mxu0
      %v519 = vadd.f32 %v395, %v518
      %520 = vmatmul.f32.gmra.mxu0 %v457
      %v521 = vpop.f32.mrf.mxu0
      %v522 = vadd.f32 %v400, %v521
      %523 = vmatmul.f32.gmra.mxu0 %v460
      %v524 = vpop.f32.mrf.mxu0
      %v525 = vadd.f32 %v405, %v524
      %526 = vmatmul.f32.gmra.mxu0 %v463
      %v527 = vpop.f32.mrf.mxu0
      %v528 = vadd.f32 %v410, %v527
      %529 = vmatmul.f32.gmra.mxu0 %v466
      %v530 = vpop.f32.mrf.mxu0
      %v531 = vadd.f32 %v415, %v530
      %532 = vmatmul.f32.gmra.mxu0 %v469
      %v533 = vpop.f32.mrf.mxu0
      %v534 = vadd.f32 %v420, %v533
      %535 = vdwg.mxu0
      %536 = vmatpush.msra.mxu0 0.0
      %537 = vmatpush.msra.mxu0 0.0
      %538 = vmatpush.msra.mxu0 0.0
      %539 = vmatpush.msra.mxu0 0.0
      %540 = vmatpush.msra.mxu0 0.0
      %541 = vmatpush.msra.mxu0 0.0
      %542 = vmatpush.msra.mxu0 0.0
      %543 = vmatpush.msra.mxu0 0.0
      %544 = vmatpush.msra.mxu0 0.0
      %545 = vmatpush.msra.mxu0 0.0
      %546 = vmatpush.msra.mxu0 0.0
      %547 = vmatpush.msra.mxu0 0.0
      %548 = vmatpush.msra.mxu0 0.0
      %549 = vmatpush.msra.mxu0 0.0
      %550 = vmatpush.msra.mxu0 %v309
      %551 = vmatpush.msra.mxu0 %v307
      %552 = vmatmul.f32.gmra.mxu0 %v424
      %v553 = vpop.f32.mrf.mxu0
      %v554 = vadd.f32 %v345, %v553
      %555 = vmatmul.f32.gmra.mxu0 %v427
      %v556 = vpop.f32.mrf.mxu0
      %v557 = vadd.f32 %v350, %v556
      %558 = vmatmul.f32.gmra.mxu0 %v430
      %v559 = vpop.f32.mrf.mxu0
      %v560 = vadd.f32 %v355, %v559
      %561 = vmatmul.f32.gmra.mxu0 %v433
      %v562 = vpop.f32.mrf.mxu0
      %v563 = vadd.f32 %v360, %v562
      %564 = vmatmul.f32.gmra.mxu0 %v436
      %v565 = vpop.f32.mrf.mxu0
      %v566 = vadd.f32 %v365, %v565
      %567 = vmatmul.f32.gmra.mxu0 %v439
      %v568 = vpop.f32.mrf.mxu0
      %v569 = vadd.f32 %v370, %v568
      %570 = vmatmul.f32.gmra.mxu0 %v442
      %v571 = vpop.f32.mrf.mxu0
      %v572 = vadd.f32 %v375, %v571
      %573 = vmatmul.f32.gmra.mxu0 %v445
      %v574 = vpop.f32.mrf.mxu0
      %v575 = vadd.f32 %v380, %v574
      %576 = vmatmul.f32.gmra.mxu0 %v448
      %v577 = vpop.f32.mrf.mxu0
      %v578 = vadd.f32 %v385, %v577
      %579 = vmatmul.f32.gmra.mxu0 %v451
      %v580 = vpop.f32.mrf.mxu0
      %v581 = vadd.f32 %v390, %v580
      %582 = vmatmul.f32.gmra.mxu0 %v454
      %v583 = vpop.f32.mrf.mxu0
      %v584 = vadd.f32 %v395, %v583
      %585 = vmatmul.f32.gmra.mxu0 %v457
      %v586 = vpop.f32.mrf.mxu0
      %v587 = vadd.f32 %v400, %v586
      %588 = vmatmul.f32.gmra.mxu0 %v460
      %v589 = vpop.f32.mrf.mxu0
      %v590 = vadd.f32 %v405, %v589
      %591 = vmatmul.f32.gmra.mxu0 %v463
      %v592 = vpop.f32.mrf.mxu0
      %v593 = vadd.f32 %v410, %v592
      %594 = vmatmul.f32.gmra.mxu0 %v466
      %v595 = vpop.f32.mrf.mxu0
      %v596 = vadd.f32 %v415, %v595
      %597 = vmatmul.f32.gmra.mxu0 %v469
      %v598 = vpop.f32.mrf.mxu0
      %v599 = vadd.f32 %v420, %v598
      %600 = vdwg.mxu0
      %v601 = vadd.f32 %v489, %v554
      %602 = vadd.xlane.f32.xlu0 %v601
      %v603 = vpop.xlane.xlu0 %602
      %v604 = vadd.f32 %v492, %v557
      %605 = vadd.xlane.f32.xlu0 %v604
      %v606 = vpop.xlane.xlu0 %605
      %v607 = vadd.f32 %v495, %v560
      %608 = vadd.xlane.f32.xlu0 %v607
      %v609 = vpop.xlane.xlu0 %608
      %v610 = vadd.f32 %v498, %v563
      %611 = vadd.xlane.f32.xlu0 %v610
      %v612 = vpop.xlane.xlu0 %611
      %v613 = vadd.f32 %v501, %v566
      %614 = vadd.xlane.f32.xlu0 %v613
      %v615 = vpop.xlane.xlu0 %614
      %v616 = vadd.f32 %v504, %v569
      %617 = vadd.xlane.f32.xlu0 %v616
      %v618 = vpop.xlane.xlu0 %617
      %v619 = vadd.f32 %v507, %v572
      %620 = vadd.xlane.f32.xlu0 %v619
      %v621 = vpop.xlane.xlu0 %620
      %v622 = vadd.f32 %v510, %v575
      %623 = vadd.xlane.f32.xlu0 %v622
      %v624 = vpop.xlane.xlu0 %623
      %v625 = vadd.f32 %v513, %v578
      %626 = vadd.xlane.f32.xlu0 %v625
      %v627 = vpop.xlane.xlu0 %626
      %v628 = vadd.f32 %v516, %v581
      %629 = vadd.xlane.f32.xlu0 %v628
      %v630 = vpop.xlane.xlu0 %629
      %v631 = vadd.f32 %v519, %v584
      %632 = vadd.xlane.f32.xlu0 %v631
      %v633 = vpop.xlane.xlu0 %632
      %v634 = vadd.f32 %v522, %v587
      %635 = vadd.xlane.f32.xlu0 %v634
      %v636 = vpop.xlane.xlu0 %635
      %v637 = vadd.f32 %v525, %v590
      %638 = vadd.xlane.f32.xlu0 %v637
      %v639 = vpop.xlane.xlu0 %638
      %v640 = vadd.f32 %v528, %v593
      %641 = vadd.xlane.f32.xlu0 %v640
      %v642 = vpop.xlane.xlu0 %641
      %v643 = vadd.f32 %v531, %v596
      %644 = vadd.xlane.f32.xlu0 %v643
      %v645 = vpop.xlane.xlu0 %644
      %v646 = vadd.f32 %v534, %v599
      %647 = vadd.xlane.f32.xlu0 %v646
      %v648 = vpop.xlane.xlu0 %647
      %v649 = vrcp.pop 256.0
      %v650 = vmul.f32 256.0, %v649
      %v651 = vsub.f32 1.0, %v650
      %v652 = vmul.f32 %v649, %v651
      %v653 = vadd.f32 %v649, %v652
      %vm654 = vweird.f32 %v649
      %v655 = vsel %vm654, %v649, %v653
      %v656 = vmul.f32 %v603, %v655
      %v657 = vmul.f32 %v606, %v655
      %v658 = vmul.f32 %v609, %v655
      %v659 = vmul.f32 %v612, %v655
      %v660 = vmul.f32 %v615, %v655
      %v661 = vmul.f32 %v618, %v655
      %v662 = vmul.f32 %v621, %v655
      %v663 = vmul.f32 %v624, %v655
      %v664 = vmul.f32 %v627, %v655
      %v665 = vmul.f32 %v630, %v655
      %v666 = vmul.f32 %v633, %v655
      %v667 = vmul.f32 %v636, %v655
      %v668 = vmul.f32 %v639, %v655
      %v669 = vmul.f32 %v642, %v655
      %v670 = vmul.f32 %v645, %v655
      %v671 = vmul.f32 %v648, %v655
      %v672 = vmax.f32 %v489, %v554
      %673 = vmax.xlane.f32.xlu0 %v672
      %v674 = vpop.xlane.xlu0 %673
      %v675 = vmax.f32 %v492, %v557
      %676 = vmax.xlane.f32.xlu0 %v675
      %v677 = vpop.xlane.xlu0 %676
      %v678 = vmax.f32 %v495, %v560
      %679 = vmax.xlane.f32.xlu0 %v678
      %v680 = vpop.xlane.xlu0 %679
      %v681 = vmax.f32 %v498, %v563
      %682 = vmax.xlane.f32.xlu0 %v681
      %v683 = vpop.xlane.xlu0 %682
      %v684 = vmax.f32 %v501, %v566
      %685 = vmax.xlane.f32.xlu0 %v684
      %v686 = vpop.xlane.xlu0 %685
      %v687 = vmax.f32 %v504, %v569
      %688 = vmax.xlane.f32.xlu0 %v687
      %v689 = vpop.xlane.xlu0 %688
      %v690 = vmax.f32 %v507, %v572
      %691 = vmax.xlane.f32.xlu0 %v690
      %v692 = vpop.xlane.xlu0 %691
      %v693 = vmax.f32 %v510, %v575
      %694 = vmax.xlane.f32.xlu0 %v693
      %v695 = vpop.xlane.xlu0 %694
      %v696 = vmax.f32 %v513, %v578
      %697 = vmax.xlane.f32.xlu0 %v696
      %v698 = vpop.xlane.xlu0 %697
      %v699 = vmax.f32 %v516, %v581
      %700 = vmax.xlane.f32.xlu0 %v699
      %v701 = vpop.xlane.xlu0 %700
      %v702 = vmax.f32 %v519, %v584
      %703 = vmax.xlane.f32.xlu0 %v702
      %v704 = vpop.xlane.xlu0 %703
      %v705 = vmax.f32 %v522, %v587
      %706 = vmax.xlane.f32.xlu0 %v705
      %v707 = vpop.xlane.xlu0 %706
      %v708 = vmax.f32 %v525, %v590
      %709 = vmax.xlane.f32.xlu0 %v708
      %v710 = vpop.xlane.xlu0 %709
      %v711 = vmax.f32 %v528, %v593
      %712 = vmax.xlane.f32.xlu0 %v711
      %v713 = vpop.xlane.xlu0 %712
      %v714 = vmax.f32 %v531, %v596
      %715 = vmax.xlane.f32.xlu0 %v714
      %v716 = vpop.xlane.xlu0 %715
      %v717 = vmax.f32 %v534, %v599
      %718 = vmax.xlane.f32.xlu0 %v717
      %v719 = vpop.xlane.xlu0 %718
      %v720 = vlaneseq
      %v721 = vand.u32 %v720, 127
      %vm722 = vcmp.eq.s32.totalorder %v721, 0
      %v723 = vsel %vm722, %v656, %v674
      %v724 = vsel %vm722, %v657, %v677
      %v725 = vsel %vm722, %v658, %v680
      %v726 = vsel %vm722, %v659, %v683
      %v727 = vsel %vm722, %v660, %v686
      %v728 = vsel %vm722, %v661, %v689
      %v729 = vsel %vm722, %v662, %v692
      %v730 = vsel %vm722, %v663, %v695
      %v731 = vsel %vm722, %v664, %v698
      %v732 = vsel %vm722, %v665, %v701
      %v733 = vsel %vm722, %v666, %v704
      %v734 = vsel %vm722, %v667, %v707
      %v735 = vsel %vm722, %v668, %v710
      %v736 = vsel %vm722, %v669, %v713
      %v737 = vsel %vm722, %v670, %v716
      %v738 = vsel %vm722, %v671, %v719
      %v739 = vld [vmem:[%s3] sm:$0xff]
      %v740 = vld [vmem:[%s3 + $0x8] sm:$0xff]
      %v741 = vld [vmem:[%s3 + $0x10] sm:$0xff]
      %v742 = vld [vmem:[%s3 + $0x18] sm:$0xff]
      %v743 = vld [vmem:[%s4] sm:$0xff]
      %v744 = vld [vmem:[%s4 + $0x8] sm:$0xff]
      %v745 = vld [vmem:[%s4 + $0x10] sm:$0xff]
      %v746 = vld [vmem:[%s4 + $0x18] sm:$0xff]
      %748 = vset.pattern.permute.xlu0 0
      %749 = vperm.xlu0 %748, %v743
      %v750 = vpop.permute.xlu0 %749
      %753 = vset.pattern.permute.xlu0 0
      %754 = vperm.xlu0 %753, %v744
      %v755 = vpop.permute.xlu0 %754
      %758 = vset.pattern.permute.xlu0 0
      %759 = vperm.xlu0 %758, %v745
      %v760 = vpop.permute.xlu0 %759
      %763 = vset.pattern.permute.xlu0 0
      %764 = vperm.xlu0 %763, %v746
      %v765 = vpop.permute.xlu0 %764
      %767 = vmatpush.msra.mxu0 %v738
      %768 = vmatpush.msra.mxu0 %v737
      %769 = vmatpush.msra.mxu0 %v736
      %770 = vmatpush.msra.mxu0 %v735
      %771 = vmatpush.msra.mxu0 %v734
      %772 = vmatpush.msra.mxu0 %v733
      %773 = vmatpush.msra.mxu0 %v732
      %774 = vmatpush.msra.mxu0 %v731
      %775 = vmatpush.msra.mxu0 %v730
      %776 = vmatpush.msra.mxu0 %v729
      %777 = vmatpush.msra.mxu0 %v728
      %778 = vmatpush.msra.mxu0 %v727
      %779 = vmatpush.msra.mxu0 %v726
      %780 = vmatpush.msra.mxu0 %v725
      %781 = vmatpush.msra.mxu0 %v724
      %782 = vmatpush.msra.mxu0 %v723
      %783 = vmatmul.f32.gmra.mxu0 %v739
      %v784 = vpop.f32.mrf.mxu0
      %v785 = vadd.f32 %v750, %v784
      %786 = vmatmul.f32.gmra.mxu0 %v740
      %v787 = vpop.f32.mrf.mxu0
      %v788 = vadd.f32 %v755, %v787
      %789 = vmatmul.f32.gmra.mxu0 %v741
      %v790 = vpop.f32.mrf.mxu0
      %v791 = vadd.f32 %v760, %v790
      %792 = vmatmul.f32.gmra.mxu0 %v742
      %v793 = vpop.f32.mrf.mxu0
      %v794 = vadd.f32 %v765, %v793
      %795 = vdwg.mxu0
      %v796 = vmax.f32 %v785, 0.0
      %v797 = vmax.f32 %v788, 0.0
      %v798 = vmax.f32 %v791, 0.0
      %v799 = vmax.f32 %v794, 0.0
      %vm800 = vcmask 15360
      %v801 = vsel %vm800, %v796, 0.0
      %802 = vadd.xlane.f32.xlu0 %v801
      %v803 = vpop.xlane.xlu0 %802
      %v804 = vsel %vm800, %v797, 0.0
      %805 = vadd.xlane.f32.xlu0 %v804
      %v806 = vpop.xlane.xlu0 %805
      %v807 = vsel %vm800, %v798, 0.0
      %808 = vadd.xlane.f32.xlu0 %v807
      %v809 = vpop.xlane.xlu0 %808
      %v810 = vsel %vm800, %v799, 0.0
      %811 = vadd.xlane.f32.xlu0 %v810
      %v812 = vpop.xlane.xlu0 %811
      %v813 = vld [vmem:[%s5] sm:$0xff]
      %v814 = vld [vmem:[%s5 + $0x8] sm:$0xff]
      %v815 = vld [vmem:[%s5 + $0x10] sm:$0xff]
      %v816 = vld [vmem:[%s5 + $0x18] sm:$0xff]
      %v817 = vld [vmem:[%s5 + $0x20] sm:$0xff]
      %v818 = vld [vmem:[%s5 + $0x28] sm:$0xff]
      %v819 = vld [vmem:[%s5 + $0x30] sm:$0xff]
      %v820 = vld [vmem:[%s5 + $0x38] sm:$0xff]
      %v821 = vld [vmem:[%s5 + $0x40] sm:$0xff]
      %v822 = vld [vmem:[%s5 + $0x48] sm:$0xff]
      %v823 = vld [vmem:[%s5 + $0x50] sm:$0xff]
      %v824 = vld [vmem:[%s5 + $0x58] sm:$0xff]
      %v825 = vld [vmem:[%s5 + $0x60] sm:$0xff]
      %v826 = vld [vmem:[%s5 + $0x68] sm:$0xff]
      %v827 = vld [vmem:[%s5 + $0x70] sm:$0xff]
      %v828 = vld [vmem:[%s5 + $0x78] sm:$0xff]
      %v829 = vld [vmem:[%s6] sm:$0xff]
      %v830 = vld [vmem:[%s6 + $0x8] sm:$0xff]
      %v831 = vld [vmem:[%s6 + $0x10] sm:$0xff]
      %v832 = vld [vmem:[%s6 + $0x18] sm:$0xff]
      %v833 = vld [vmem:[%s6 + $0x20] sm:$0xff]
      %v834 = vld [vmem:[%s6 + $0x28] sm:$0xff]
      %v835 = vld [vmem:[%s6 + $0x30] sm:$0xff]
      %v836 = vld [vmem:[%s6 + $0x38] sm:$0xff]
      %v837 = vld [vmem:[%s6 + $0x40] sm:$0xff]
      %v838 = vld [vmem:[%s6 + $0x48] sm:$0xff]
      %v839 = vld [vmem:[%s6 + $0x50] sm:$0xff]
      %v840 = vld [vmem:[%s6 + $0x58] sm:$0xff]
      %v841 = vld [vmem:[%s6 + $0x60] sm:$0xff]
      %v842 = vld [vmem:[%s6 + $0x68] sm:$0xff]
      %v843 = vld [vmem:[%s6 + $0x70] sm:$0xff]
      %v844 = vld [vmem:[%s6 + $0x78] sm:$0xff]
      %v845 = vmul.f32 %v829, 2.0
      %v846 = vmul.f32 %v830, 2.0
      %v847 = vmul.f32 %v831, 2.0
      %v848 = vmul.f32 %v832, 2.0
      %v849 = vmul.f32 %v833, 2.0
      %v850 = vmul.f32 %v834, 2.0
      %v851 = vmul.f32 %v835, 2.0
      %v852 = vmul.f32 %v836, 2.0
      %v853 = vmul.f32 %v837, 2.0
      %v854 = vmul.f32 %v838, 2.0
      %v855 = vmul.f32 %v839, 2.0
      %v856 = vmul.f32 %v840, 2.0
      %v857 = vmul.f32 %v841, 2.0
      %v858 = vmul.f32 %v842, 2.0
      %v859 = vmul.f32 %v843, 2.0
      %v860 = vmul.f32 %v844, 2.0
      %vm861 = vcmask 261120
      %v863 = vsel %vm861, %v813, 0
      %v866 = vsel %vm861, %v814, 0
      %v869 = vsel %vm861, %v815, 0
      %v872 = vsel %vm861, %v816, 0
      %v875 = vsel %vm861, %v817, 0
      %v878 = vsel %vm861, %v818, 0
      %v881 = vsel %vm861, %v819, 0
      %v884 = vsel %vm861, %v820, 0
      %v887 = vsel %vm861, %v821, 0
      %v890 = vsel %vm861, %v822, 0
      %v893 = vsel %vm861, %v823, 0
      %v896 = vsel %vm861, %v824, 0
      %v899 = vsel %vm861, %v825, 0
      %v902 = vsel %vm861, %v826, 0
      %v905 = vsel %vm861, %v827, 0
      %v908 = vsel %vm861, %v828, 0
      %910 = vmatpush.msra.mxu0 0.0
      %911 = vmatpush.msra.mxu0 0.0
      %912 = vmatpush.msra.mxu0 0.0
      %913 = vmatpush.msra.mxu0 0.0
      %914 = vmatpush.msra.mxu0 0.0
      %915 = vmatpush.msra.mxu0 0.0
      %916 = vmatpush.msra.mxu0 0.0
      %917 = vmatpush.msra.mxu0 0.0
      %918 = vmatpush.msra.mxu0 0.0
      %919 = vmatpush.msra.mxu0 0.0
      %920 = vmatpush.msra.mxu0 0.0
      %921 = vmatpush.msra.mxu0 0.0
      %922 = vmatpush.msra.mxu0 %v812
      %923 = vmatpush.msra.mxu0 %v809
      %924 = vmatpush.msra.mxu0 %v806
      %925 = vmatpush.msra.mxu0 %v803
      %926 = vmatmul.f32.gmra.mxu0 %v863
      %v927 = vpop.f32.mrf.mxu0
      %v928 = vadd.f32 %v845, %v927
      %929 = vmatmul.f32.gmra.mxu0 %v866
      %v930 = vpop.f32.mrf.mxu0
      %v931 = vadd.f32 %v846, %v930
      %932 = vmatmul.f32.gmra.mxu0 %v869
      %v933 = vpop.f32.mrf.mxu0
      %v934 = vadd.f32 %v847, %v933
      %935 = vmatmul.f32.gmra.mxu0 %v872
      %v936 = vpop.f32.mrf.mxu0
      %v937 = vadd.f32 %v848, %v936
      %938 = vmatmul.f32.gmra.mxu0 %v875
      %v939 = vpop.f32.mrf.mxu0
      %v940 = vadd.f32 %v849, %v939
      %941 = vmatmul.f32.gmra.mxu0 %v878
      %v942 = vpop.f32.mrf.mxu0
      %v943 = vadd.f32 %v850, %v942
      %944 = vmatmul.f32.gmra.mxu0 %v881
      %v945 = vpop.f32.mrf.mxu0
      %v946 = vadd.f32 %v851, %v945
      %947 = vmatmul.f32.gmra.mxu0 %v884
      %v948 = vpop.f32.mrf.mxu0
      %v949 = vadd.f32 %v852, %v948
      %950 = vmatmul.f32.gmra.mxu0 %v887
      %v951 = vpop.f32.mrf.mxu0
      %v952 = vadd.f32 %v853, %v951
      %953 = vmatmul.f32.gmra.mxu0 %v890
      %v954 = vpop.f32.mrf.mxu0
      %v955 = vadd.f32 %v854, %v954
      %956 = vmatmul.f32.gmra.mxu0 %v893
      %v957 = vpop.f32.mrf.mxu0
      %v958 = vadd.f32 %v855, %v957
      %959 = vmatmul.f32.gmra.mxu0 %v896
      %v960 = vpop.f32.mrf.mxu0
      %v961 = vadd.f32 %v856, %v960
      %962 = vmatmul.f32.gmra.mxu0 %v899
      %v963 = vpop.f32.mrf.mxu0
      %v964 = vadd.f32 %v857, %v963
      %965 = vmatmul.f32.gmra.mxu0 %v902
      %v966 = vpop.f32.mrf.mxu0
      %v967 = vadd.f32 %v858, %v966
      %968 = vmatmul.f32.gmra.mxu0 %v905
      %v969 = vpop.f32.mrf.mxu0
      %v970 = vadd.f32 %v859, %v969
      %971 = vmatmul.f32.gmra.mxu0 %v908
      %v972 = vpop.f32.mrf.mxu0
      %v973 = vadd.f32 %v860, %v972
      %974 = vdwg.mxu0
      %v975 = vsub.f32 0.0, %v928
      %v976 = vsub.f32 0.0, %v931
      %v977 = vsub.f32 0.0, %v934
      %v978 = vsub.f32 0.0, %v937
      %v979 = vsub.f32 0.0, %v940
      %v980 = vsub.f32 0.0, %v943
      %v981 = vsub.f32 0.0, %v946
      %v982 = vsub.f32 0.0, %v949
      %v983 = vsub.f32 0.0, %v952
      %v984 = vsub.f32 0.0, %v955
      %v985 = vsub.f32 0.0, %v958
      %v986 = vsub.f32 0.0, %v961
      %v987 = vsub.f32 0.0, %v964
      %v988 = vsub.f32 0.0, %v967
      %v989 = vsub.f32 0.0, %v970
      %v990 = vsub.f32 0.0, %v973
      %v991 = vmul.f32 %v975, 1.442695
      %v992 = vpow.pop %v991
      %v993 = vmul.f32 %v976, 1.442695
      %v994 = vpow.pop %v993
      %v995 = vmul.f32 %v977, 1.442695
      %v996 = vpow.pop %v995
      %v997 = vmul.f32 %v978, 1.442695
      %v998 = vpow.pop %v997
      %v999 = vmul.f32 %v979, 1.442695
      %v1000 = vpow.pop %v999
      %v1001 = vmul.f32 %v980, 1.442695
      %v1002 = vpow.pop %v1001
      %v1003 = vmul.f32 %v981, 1.442695
      %v1004 = vpow.pop %v1003
      %v1005 = vmul.f32 %v982, 1.442695
      %v1006 = vpow.pop %v1005
      %v1007 = vmul.f32 %v983, 1.442695
      %v1008 = vpow.pop %v1007
      %v1009 = vmul.f32 %v984, 1.442695
      %v1010 = vpow.pop %v1009
      %v1011 = vmul.f32 %v985, 1.442695
      %v1012 = vpow.pop %v1011
      %v1013 = vmul.f32 %v986, 1.442695
      %v1014 = vpow.pop %v1013
      %v1015 = vmul.f32 %v987, 1.442695
      %v1016 = vpow.pop %v1015
      %v1017 = vmul.f32 %v988, 1.442695
      %v1018 = vpow.pop %v1017
      %v1019 = vmul.f32 %v989, 1.442695
      %v1020 = vpow.pop %v1019
      %v1021 = vmul.f32 %v990, 1.442695
      %v1022 = vpow.pop %v1021
      %v1023 = vadd.f32 %v992, 1.0
      %v1024 = vadd.f32 %v994, 1.0
      %v1025 = vadd.f32 %v996, 1.0
      %v1026 = vadd.f32 %v998, 1.0
      %v1027 = vadd.f32 %v1000, 1.0
      %v1028 = vadd.f32 %v1002, 1.0
      %v1029 = vadd.f32 %v1004, 1.0
      %v1030 = vadd.f32 %v1006, 1.0
      %v1031 = vadd.f32 %v1008, 1.0
      %v1032 = vadd.f32 %v1010, 1.0
      %v1033 = vadd.f32 %v1012, 1.0
      %v1034 = vadd.f32 %v1014, 1.0
      %v1035 = vadd.f32 %v1016, 1.0
      %v1036 = vadd.f32 %v1018, 1.0
      %v1037 = vadd.f32 %v1020, 1.0
      %v1038 = vadd.f32 %v1022, 1.0
      %v1039 = vrcp.pop %v1023
      %v1040 = vmul.f32 %v1023, %v1039
      %v1041 = vsub.f32 1.0, %v1040
      %v1042 = vmul.f32 %v1039, %v1041
      %v1043 = vadd.f32 %v1039, %v1042
      %vm1044 = vweird.f32 %v1023
      %vm1045 = vweird.f32 %v1039
      %vm1046 = vmor %vm1044, %vm1045
      %v1047 = vsel %vm1046, %v1039, %v1043
      %v1048 = vand.u32 2147483647, %v1023
      %vm1049 = vcmp.eq.f32.partialorder %v1048, 8.507059e+37
      %v1050 = vand.u32 %v1023, 2147483648
      %v1051 = vor.u32 1.1754944e-38, %v1050
      %v1052 = vsel %vm1049, %v1051, %v1047
      %v1053 = vmul.f32 1.0, %v1052
      %v1054 = vrcp.pop %v1024
      %v1055 = vmul.f32 %v1024, %v1054
      %v1056 = vsub.f32 1.0, %v1055
      %v1057 = vmul.f32 %v1054, %v1056
      %v1058 = vadd.f32 %v1054, %v1057
      %vm1059 = vweird.f32 %v1024
      %vm1060 = vweird.f32 %v1054
      %vm1061 = vmor %vm1059, %vm1060
      %v1062 = vsel %vm1061, %v1054, %v1058
      %v1063 = vand.u32 2147483647, %v1024
      %vm1064 = vcmp.eq.f32.partialorder %v1063, 8.507059e+37
      %v1065 = vand.u32 %v1024, 2147483648
      %v1066 = vor.u32 1.1754944e-38, %v1065
      %v1067 = vsel %vm1064, %v1066, %v1062
      %v1068 = vmul.f32 1.0, %v1067
      %v1069 = vrcp.pop %v1025
      %v1070 = vmul.f32 %v1025, %v1069
      %v1071 = vsub.f32 1.0, %v1070
      %v1072 = vmul.f32 %v1069, %v1071
      %v1073 = vadd.f32 %v1069, %v1072
      %vm1074 = vweird.f32 %v1025
      %vm1075 = vweird.f32 %v1069
      %vm1076 = vmor %vm1074, %vm1075
      %v1077 = vsel %vm1076, %v1069, %v1073
      %v1078 = vand.u32 2147483647, %v1025
      %vm1079 = vcmp.eq.f32.partialorder %v1078, 8.507059e+37
      %v1080 = vand.u32 %v1025, 2147483648
      %v1081 = vor.u32 1.1754944e-38, %v1080
      %v1082 = vsel %vm1079, %v1081, %v1077
      %v1083 = vmul.f32 1.0, %v1082
      %v1084 = vrcp.pop %v1026
      %v1085 = vmul.f32 %v1026, %v1084
      %v1086 = vsub.f32 1.0, %v1085
      %v1087 = vmul.f32 %v1084, %v1086
      %v1088 = vadd.f32 %v1084, %v1087
      %vm1089 = vweird.f32 %v1026
      %vm1090 = vweird.f32 %v1084
      %vm1091 = vmor %vm1089, %vm1090
      %v1092 = vsel %vm1091, %v1084, %v1088
      %v1093 = vand.u32 2147483647, %v1026
      %vm1094 = vcmp.eq.f32.partialorder %v1093, 8.507059e+37
      %v1095 = vand.u32 %v1026, 2147483648
      %v1096 = vor.u32 1.1754944e-38, %v1095
      %v1097 = vsel %vm1094, %v1096, %v1092
      %v1098 = vmul.f32 1.0, %v1097
      %v1099 = vrcp.pop %v1027
      %v1100 = vmul.f32 %v1027, %v1099
      %v1101 = vsub.f32 1.0, %v1100
      %v1102 = vmul.f32 %v1099, %v1101
      %v1103 = vadd.f32 %v1099, %v1102
      %vm1104 = vweird.f32 %v1027
      %vm1105 = vweird.f32 %v1099
      %vm1106 = vmor %vm1104, %vm1105
      %v1107 = vsel %vm1106, %v1099, %v1103
      %v1108 = vand.u32 2147483647, %v1027
      %vm1109 = vcmp.eq.f32.partialorder %v1108, 8.507059e+37
      %v1110 = vand.u32 %v1027, 2147483648
      %v1111 = vor.u32 1.1754944e-38, %v1110
      %v1112 = vsel %vm1109, %v1111, %v1107
      %v1113 = vmul.f32 1.0, %v1112
      %v1114 = vrcp.pop %v1028
      %v1115 = vmul.f32 %v1028, %v1114
      %v1116 = vsub.f32 1.0, %v1115
      %v1117 = vmul.f32 %v1114, %v1116
      %v1118 = vadd.f32 %v1114, %v1117
      %vm1119 = vweird.f32 %v1028
      %vm1120 = vweird.f32 %v1114
      %vm1121 = vmor %vm1119, %vm1120
      %v1122 = vsel %vm1121, %v1114, %v1118
      %v1123 = vand.u32 2147483647, %v1028
      %vm1124 = vcmp.eq.f32.partialorder %v1123, 8.507059e+37
      %v1125 = vand.u32 %v1028, 2147483648
      %v1126 = vor.u32 1.1754944e-38, %v1125
      %v1127 = vsel %vm1124, %v1126, %v1122
      %v1128 = vmul.f32 1.0, %v1127
      %v1129 = vrcp.pop %v1029
      %v1130 = vmul.f32 %v1029, %v1129
      %v1131 = vsub.f32 1.0, %v1130
      %v1132 = vmul.f32 %v1129, %v1131
      %v1133 = vadd.f32 %v1129, %v1132
      %vm1134 = vweird.f32 %v1029
      %vm1135 = vweird.f32 %v1129
      %vm1136 = vmor %vm1134, %vm1135
      %v1137 = vsel %vm1136, %v1129, %v1133
      %v1138 = vand.u32 2147483647, %v1029
      %vm1139 = vcmp.eq.f32.partialorder %v1138, 8.507059e+37
      %v1140 = vand.u32 %v1029, 2147483648
      %v1141 = vor.u32 1.1754944e-38, %v1140
      %v1142 = vsel %vm1139, %v1141, %v1137
      %v1143 = vmul.f32 1.0, %v1142
      %v1144 = vrcp.pop %v1030
      %v1145 = vmul.f32 %v1030, %v1144
      %v1146 = vsub.f32 1.0, %v1145
      %v1147 = vmul.f32 %v1144, %v1146
      %v1148 = vadd.f32 %v1144, %v1147
      %vm1149 = vweird.f32 %v1030
      %vm1150 = vweird.f32 %v1144
      %vm1151 = vmor %vm1149, %vm1150
      %v1152 = vsel %vm1151, %v1144, %v1148
      %v1153 = vand.u32 2147483647, %v1030
      %vm1154 = vcmp.eq.f32.partialorder %v1153, 8.507059e+37
      %v1155 = vand.u32 %v1030, 2147483648
      %v1156 = vor.u32 1.1754944e-38, %v1155
      %v1157 = vsel %vm1154, %v1156, %v1152
      %v1158 = vmul.f32 1.0, %v1157
      %v1159 = vrcp.pop %v1031
      %v1160 = vmul.f32 %v1031, %v1159
      %v1161 = vsub.f32 1.0, %v1160
      %v1162 = vmul.f32 %v1159, %v1161
      %v1163 = vadd.f32 %v1159, %v1162
      %vm1164 = vweird.f32 %v1031
      %vm1165 = vweird.f32 %v1159
      %vm1166 = vmor %vm1164, %vm1165
      %v1167 = vsel %vm1166, %v1159, %v1163
      %v1168 = vand.u32 2147483647, %v1031
      %vm1169 = vcmp.eq.f32.partialorder %v1168, 8.507059e+37
      %v1170 = vand.u32 %v1031, 2147483648
      %v1171 = vor.u32 1.1754944e-38, %v1170
      %v1172 = vsel %vm1169, %v1171, %v1167
      %v1173 = vmul.f32 1.0, %v1172
      %v1174 = vrcp.pop %v1032
      %v1175 = vmul.f32 %v1032, %v1174
      %v1176 = vsub.f32 1.0, %v1175
      %v1177 = vmul.f32 %v1174, %v1176
      %v1178 = vadd.f32 %v1174, %v1177
      %vm1179 = vweird.f32 %v1032
      %vm1180 = vweird.f32 %v1174
      %vm1181 = vmor %vm1179, %vm1180
      %v1182 = vsel %vm1181, %v1174, %v1178
      %v1183 = vand.u32 2147483647, %v1032
      %vm1184 = vcmp.eq.f32.partialorder %v1183, 8.507059e+37
      %v1185 = vand.u32 %v1032, 2147483648
      %v1186 = vor.u32 1.1754944e-38, %v1185
      %v1187 = vsel %vm1184, %v1186, %v1182
      %v1188 = vmul.f32 1.0, %v1187
      %v1189 = vrcp.pop %v1033
      %v1190 = vmul.f32 %v1033, %v1189
      %v1191 = vsub.f32 1.0, %v1190
      %v1192 = vmul.f32 %v1189, %v1191
      %v1193 = vadd.f32 %v1189, %v1192
      %vm1194 = vweird.f32 %v1033
      %vm1195 = vweird.f32 %v1189
      %vm1196 = vmor %vm1194, %vm1195
      %v1197 = vsel %vm1196, %v1189, %v1193
      %v1198 = vand.u32 2147483647, %v1033
      %vm1199 = vcmp.eq.f32.partialorder %v1198, 8.507059e+37
      %v1200 = vand.u32 %v1033, 2147483648
      %v1201 = vor.u32 1.1754944e-38, %v1200
      %v1202 = vsel %vm1199, %v1201, %v1197
      %v1203 = vmul.f32 1.0, %v1202
      %v1204 = vrcp.pop %v1034
      %v1205 = vmul.f32 %v1034, %v1204
      %v1206 = vsub.f32 1.0, %v1205
      %v1207 = vmul.f32 %v1204, %v1206
      %v1208 = vadd.f32 %v1204, %v1207
      %vm1209 = vweird.f32 %v1034
      %vm1210 = vweird.f32 %v1204
      %vm1211 = vmor %vm1209, %vm1210
      %v1212 = vsel %vm1211, %v1204, %v1208
      %v1213 = vand.u32 2147483647, %v1034
      %vm1214 = vcmp.eq.f32.partialorder %v1213, 8.507059e+37
      %v1215 = vand.u32 %v1034, 2147483648
      %v1216 = vor.u32 1.1754944e-38, %v1215
      %v1217 = vsel %vm1214, %v1216, %v1212
      %v1218 = vmul.f32 1.0, %v1217
      %v1219 = vrcp.pop %v1035
      %v1220 = vmul.f32 %v1035, %v1219
      %v1221 = vsub.f32 1.0, %v1220
      %v1222 = vmul.f32 %v1219, %v1221
      %v1223 = vadd.f32 %v1219, %v1222
      %vm1224 = vweird.f32 %v1035
      %vm1225 = vweird.f32 %v1219
      %vm1226 = vmor %vm1224, %vm1225
      %v1227 = vsel %vm1226, %v1219, %v1223
      %v1228 = vand.u32 2147483647, %v1035
      %vm1229 = vcmp.eq.f32.partialorder %v1228, 8.507059e+37
      %v1230 = vand.u32 %v1035, 2147483648
      %v1231 = vor.u32 1.1754944e-38, %v1230
      %v1232 = vsel %vm1229, %v1231, %v1227
      %v1233 = vmul.f32 1.0, %v1232
      %v1234 = vrcp.pop %v1036
      %v1235 = vmul.f32 %v1036, %v1234
      %v1236 = vsub.f32 1.0, %v1235
      %v1237 = vmul.f32 %v1234, %v1236
      %v1238 = vadd.f32 %v1234, %v1237
      %vm1239 = vweird.f32 %v1036
      %vm1240 = vweird.f32 %v1234
      %vm1241 = vmor %vm1239, %vm1240
      %v1242 = vsel %vm1241, %v1234, %v1238
      %v1243 = vand.u32 2147483647, %v1036
      %vm1244 = vcmp.eq.f32.partialorder %v1243, 8.507059e+37
      %v1245 = vand.u32 %v1036, 2147483648
      %v1246 = vor.u32 1.1754944e-38, %v1245
      %v1247 = vsel %vm1244, %v1246, %v1242
      %v1248 = vmul.f32 1.0, %v1247
      %v1249 = vrcp.pop %v1037
      %v1250 = vmul.f32 %v1037, %v1249
      %v1251 = vsub.f32 1.0, %v1250
      %v1252 = vmul.f32 %v1249, %v1251
      %v1253 = vadd.f32 %v1249, %v1252
      %vm1254 = vweird.f32 %v1037
      %vm1255 = vweird.f32 %v1249
      %vm1256 = vmor %vm1254, %vm1255
      %v1257 = vsel %vm1256, %v1249, %v1253
      %v1258 = vand.u32 2147483647, %v1037
      %vm1259 = vcmp.eq.f32.partialorder %v1258, 8.507059e+37
      %v1260 = vand.u32 %v1037, 2147483648
      %v1261 = vor.u32 1.1754944e-38, %v1260
      %v1262 = vsel %vm1259, %v1261, %v1257
      %v1263 = vmul.f32 1.0, %v1262
      %v1264 = vrcp.pop %v1038
      %v1265 = vmul.f32 %v1038, %v1264
      %v1266 = vsub.f32 1.0, %v1265
      %v1267 = vmul.f32 %v1264, %v1266
      %v1268 = vadd.f32 %v1264, %v1267
      %vm1269 = vweird.f32 %v1038
      %vm1270 = vweird.f32 %v1264
      %vm1271 = vmor %vm1269, %vm1270
      %v1272 = vsel %vm1271, %v1264, %v1268
      %v1273 = vand.u32 2147483647, %v1038
      %vm1274 = vcmp.eq.f32.partialorder %v1273, 8.507059e+37
      %v1275 = vand.u32 %v1038, 2147483648
      %v1276 = vor.u32 1.1754944e-38, %v1275
      %v1277 = vsel %vm1274, %v1276, %v1272
      %v1278 = vmul.f32 1.0, %v1277
      %1280 = vset.pattern.permute.xlu0 0
      %1281 = vperm.xlu0 %1280, %v1053
      %v1282 = vpop.permute.xlu0 %1281
      %1285 = vset.pattern.permute.xlu0 0
      %1286 = vperm.xlu0 %1285, %v1068
      %v1287 = vpop.permute.xlu0 %1286
      %1290 = vset.pattern.permute.xlu0 0
      %1291 = vperm.xlu0 %1290, %v1083
      %v1292 = vpop.permute.xlu0 %1291
      %1295 = vset.pattern.permute.xlu0 0
      %1296 = vperm.xlu0 %1295, %v1098
      %v1297 = vpop.permute.xlu0 %1296
      %1300 = vset.pattern.permute.xlu0 0
      %1301 = vperm.xlu0 %1300, %v1113
      %v1302 = vpop.permute.xlu0 %1301
      %1305 = vset.pattern.permute.xlu0 0
      %1306 = vperm.xlu0 %1305, %v1128
      %v1307 = vpop.permute.xlu0 %1306
      %1310 = vset.pattern.permute.xlu0 0
      %1311 = vperm.xlu0 %1310, %v1143
      %v1312 = vpop.permute.xlu0 %1311
      %1315 = vset.pattern.permute.xlu0 0
      %1316 = vperm.xlu0 %1315, %v1158
      %v1317 = vpop.permute.xlu0 %1316
      %1320 = vset.pattern.permute.xlu0 0
      %1321 = vperm.xlu0 %1320, %v1173
      %v1322 = vpop.permute.xlu0 %1321
      %1325 = vset.pattern.permute.xlu0 0
      %1326 = vperm.xlu0 %1325, %v1188
      %v1327 = vpop.permute.xlu0 %1326
      %1330 = vset.pattern.permute.xlu0 0
      %1331 = vperm.xlu0 %1330, %v1203
      %v1332 = vpop.permute.xlu0 %1331
      %1335 = vset.pattern.permute.xlu0 0
      %1336 = vperm.xlu0 %1335, %v1218
      %v1337 = vpop.permute.xlu0 %1336
      %1340 = vset.pattern.permute.xlu0 0
      %1341 = vperm.xlu0 %1340, %v1233
      %v1342 = vpop.permute.xlu0 %1341
      %1345 = vset.pattern.permute.xlu0 0
      %1346 = vperm.xlu0 %1345, %v1248
      %v1347 = vpop.permute.xlu0 %1346
      %1350 = vset.pattern.permute.xlu0 0
      %1351 = vperm.xlu0 %1350, %v1263
      %v1352 = vpop.permute.xlu0 %1351
      %1355 = vset.pattern.permute.xlu0 0
      %1356 = vperm.xlu0 %1355, %v1278
      %v1357 = vpop.permute.xlu0 %1356
      %v1359 = vmul.f32 %v489, %v1282
      %v1360 = vmul.f32 %v554, %v1282
      %v1361 = vmul.f32 %v492, %v1287
      %v1362 = vmul.f32 %v557, %v1287
      %v1363 = vmul.f32 %v495, %v1292
      %v1364 = vmul.f32 %v560, %v1292
      %v1365 = vmul.f32 %v498, %v1297
      %v1366 = vmul.f32 %v563, %v1297
      %v1367 = vmul.f32 %v501, %v1302
      %v1368 = vmul.f32 %v566, %v1302
      %v1369 = vmul.f32 %v504, %v1307
      %v1370 = vmul.f32 %v569, %v1307
      %v1371 = vmul.f32 %v507, %v1312
      %v1372 = vmul.f32 %v572, %v1312
      %v1373 = vmul.f32 %v510, %v1317
      %v1374 = vmul.f32 %v575, %v1317
      %v1375 = vmul.f32 %v513, %v1322
      %v1376 = vmul.f32 %v578, %v1322
      %v1377 = vmul.f32 %v516, %v1327
      %v1378 = vmul.f32 %v581, %v1327
      %v1379 = vmul.f32 %v519, %v1332
      %v1380 = vmul.f32 %v584, %v1332
      %v1381 = vmul.f32 %v522, %v1337
      %v1382 = vmul.f32 %v587, %v1337
      %v1383 = vmul.f32 %v525, %v1342
      %v1384 = vmul.f32 %v590, %v1342
      %v1385 = vmul.f32 %v528, %v1347
      %v1386 = vmul.f32 %v593, %v1347
      %v1387 = vmul.f32 %v531, %v1352
      %v1388 = vmul.f32 %v596, %v1352
      %v1389 = vmul.f32 %v534, %v1357
      %v1390 = vmul.f32 %v599, %v1357
      %1391 = vst [vmem:[%s305] sm:$0xff] %v1359
      %1392 = vst [vmem:[%s305 + $0x8] sm:$0xff] %v1360
      %1393 = vst [vmem:[%s305 + $0x10] sm:$0xff] %v1361
      %1394 = vst [vmem:[%s305 + $0x18] sm:$0xff] %v1362
      %1395 = vst [vmem:[%s305 + $0x20] sm:$0xff] %v1363
      %1396 = vst [vmem:[%s305 + $0x28] sm:$0xff] %v1364
      %1397 = vst [vmem:[%s305 + $0x30] sm:$0xff] %v1365
      %1398 = vst [vmem:[%s305 + $0x38] sm:$0xff] %v1366
      %1399 = vst [vmem:[%s305 + $0x40] sm:$0xff] %v1367
      %1400 = vst [vmem:[%s305 + $0x48] sm:$0xff] %v1368
      %1401 = vst [vmem:[%s305 + $0x50] sm:$0xff] %v1369
      %1402 = vst [vmem:[%s305 + $0x58] sm:$0xff] %v1370
      %1403 = vst [vmem:[%s305 + $0x60] sm:$0xff] %v1371
      %1404 = vst [vmem:[%s305 + $0x68] sm:$0xff] %v1372
      %1405 = vst [vmem:[%s305 + $0x70] sm:$0xff] %v1373
      %1406 = vst [vmem:[%s305 + $0x78] sm:$0xff] %v1374
      %1407 = vst [vmem:[%s305 + $0x80] sm:$0xff] %v1375
      %1408 = vst [vmem:[%s305 + $0x88] sm:$0xff] %v1376
      %1409 = vst [vmem:[%s305 + $0x90] sm:$0xff] %v1377
      %1410 = vst [vmem:[%s305 + $0x98] sm:$0xff] %v1378
      %1411 = vst [vmem:[%s305 + $0xa0] sm:$0xff] %v1379
      %1412 = vst [vmem:[%s305 + $0xa8] sm:$0xff] %v1380
      %1413 = vst [vmem:[%s305 + $0xb0] sm:$0xff] %v1381
      %1414 = vst [vmem:[%s305 + $0xb8] sm:$0xff] %v1382
      %1415 = vst [vmem:[%s305 + $0xc0] sm:$0xff] %v1383
      %1416 = vst [vmem:[%s305 + $0xc8] sm:$0xff] %v1384
      %1417 = vst [vmem:[%s305 + $0xd0] sm:$0xff] %v1385
      %1418 = vst [vmem:[%s305 + $0xd8] sm:$0xff] %v1386
      %1419 = vst [vmem:[%s305 + $0xe0] sm:$0xff] %v1387
      %1420 = vst [vmem:[%s305 + $0xe8] sm:$0xff] %v1388
      %1421 = vst [vmem:[%s305 + $0xf0] sm:$0xff] %v1389
      %1422 = vst [vmem:[%s305 + $0xf8] sm:$0xff] %v1390
      %v1423 = vadd.f32 %v1359, %v1361
      %v1424 = vadd.f32 %v1423, %v1363
      %v1425 = vadd.f32 %v1424, %v1365
      %v1426 = vadd.f32 %v1425, %v1367
      %v1427 = vadd.f32 %v1426, %v1369
      %v1428 = vadd.f32 %v1427, %v1371
      %v1429 = vadd.f32 %v1428, %v1373
      %v1430 = vadd.f32 %v1429, %v1375
      %v1431 = vadd.f32 %v1430, %v1377
      %v1432 = vadd.f32 %v1431, %v1379
      %v1433 = vadd.f32 %v1432, %v1381
      %v1434 = vadd.f32 %v1433, %v1383
      %v1435 = vadd.f32 %v1434, %v1385
      %v1436 = vadd.f32 %v1435, %v1387
      %v1437 = vadd.f32 %v1436, %v1389
      %v1438 = vrot.slane %v1437, 4
      %v1439 = vadd.f32 %v1437, %v1438
      %v1440 = vrot.slane %v1439, 2
      %v1441 = vadd.f32 %v1439, %v1440
      %v1442 = vrot.slane %v1441, 1
      %v1443 = vadd.f32 %v1441, %v1442
      %v1444 = vadd.f32 %v1360, %v1362
      %v1445 = vadd.f32 %v1444, %v1364
      %v1446 = vadd.f32 %v1445, %v1366
      %v1447 = vadd.f32 %v1446, %v1368
      %v1448 = vadd.f32 %v1447, %v1370
      %v1449 = vadd.f32 %v1448, %v1372
      %v1450 = vadd.f32 %v1449, %v1374
      %v1451 = vadd.f32 %v1450, %v1376
      %v1452 = vadd.f32 %v1451, %v1378
      %v1453 = vadd.f32 %v1452, %v1380
      %v1454 = vadd.f32 %v1453, %v1382
      %v1455 = vadd.f32 %v1454, %v1384
      %v1456 = vadd.f32 %v1455, %v1386
      %v1457 = vadd.f32 %v1456, %v1388
      %v1458 = vadd.f32 %v1457, %v1390
      %v1459 = vrot.slane %v1458, 4
      %v1460 = vadd.f32 %v1458, %v1459
      %v1461 = vrot.slane %v1460, 2
      %v1462 = vadd.f32 %v1460, %v1461
      %v1463 = vrot.slane %v1462, 1
      %v1464 = vadd.f32 %v1462, %v1463
      %v1465 = vrcp.pop 128.0
      %v1466 = vmul.f32 128.0, %v1465
      %v1467 = vsub.f32 1.0, %v1466
      %v1468 = vmul.f32 %v1465, %v1467
      %v1469 = vadd.f32 %v1465, %v1468
      %vm1470 = vweird.f32 %v1465
      %v1471 = vsel %vm1470, %v1465, %v1469
      %v1472 = vmul.f32 %v1443, %v1471
      %v1473 = vmul.f32 %v1464, %v1471
      %v1474 = vmax.f32 %v1359, %v1363
      %v1475 = vmax.f32 %v1361, %v1365
      %v1476 = vmax.f32 %v1474, %v1367
      %v1477 = vmax.f32 %v1475, %v1369
      %v1478 = vmax.f32 %v1476, %v1371
      %v1479 = vmax.f32 %v1477, %v1373
      %v1480 = vmax.f32 %v1478, %v1375
      %v1481 = vmax.f32 %v1479, %v1377
      %v1482 = vmax.f32 %v1480, %v1379
      %v1483 = vmax.f32 %v1481, %v1381
      %v1484 = vmax.f32 %v1482, %v1383
      %v1485 = vmax.f32 %v1483, %v1385
      %v1486 = vmax.f32 %v1484, %v1387
      %v1487 = vmax.f32 %v1485, %v1389
      %v1488 = vmax.f32 %v1486, %v1487
      %v1489 = vrot.slane %v1488, 4
      %v1490 = vmax.f32 %v1488, %v1489
      %v1491 = vrot.slane %v1490, 2
      %v1492 = vmax.f32 %v1490, %v1491
      %v1493 = vrot.slane %v1492, 1
      %v1494 = vmax.f32 %v1492, %v1493
      %v1495 = vmax.f32 %v1360, %v1364
      %v1496 = vmax.f32 %v1362, %v1366
      %v1497 = vmax.f32 %v1495, %v1368
      %v1498 = vmax.f32 %v1496, %v1370
      %v1499 = vmax.f32 %v1497, %v1372
      %v1500 = vmax.f32 %v1498, %v1374
      %v1501 = vmax.f32 %v1499, %v1376
      %v1502 = vmax.f32 %v1500, %v1378
      %v1503 = vmax.f32 %v1501, %v1380
      %v1504 = vmax.f32 %v1502, %v1382
      %v1505 = vmax.f32 %v1503, %v1384
      %v1506 = vmax.f32 %v1504, %v1386
      %v1507 = vmax.f32 %v1505, %v1388
      %v1508 = vmax.f32 %v1506, %v1390
      %v1509 = vmax.f32 %v1507, %v1508
      %v1510 = vrot.slane %v1509, 4
      %v1511 = vmax.f32 %v1509, %v1510
      %v1512 = vrot.slane %v1511, 2
      %v1513 = vmax.f32 %v1511, %v1512
      %v1514 = vrot.slane %v1513, 1
      %v1515 = vmax.f32 %v1513, %v1514
      %v1516 = vld [vmem:[%s7] sm:$0xff]
      %v1517 = vld [vmem:[%s7 + $0x8] sm:$0xff]
      %v1518 = vld [vmem:[%s7 + $0x10] sm:$0xff]
      %v1519 = vld [vmem:[%s7 + $0x18] sm:$0xff]
      %v1520 = vld [vmem:[%s7 + $0x20] sm:$0xff]
      %v1521 = vld [vmem:[%s7 + $0x28] sm:$0xff]
      %v1522 = vld [vmem:[%s7 + $0x30] sm:$0xff]
      %v1523 = vld [vmem:[%s7 + $0x38] sm:$0xff]
      %v1524 = vld [vmem:[%s7 + $0x40] sm:$0xff]
      %v1525 = vld [vmem:[%s7 + $0x48] sm:$0xff]
      %v1526 = vld [vmem:[%s7 + $0x50] sm:$0xff]
      %v1527 = vld [vmem:[%s7 + $0x58] sm:$0xff]
      %v1528 = vld [vmem:[%s7 + $0x60] sm:$0xff]
      %v1529 = vld [vmem:[%s7 + $0x68] sm:$0xff]
      %v1530 = vld [vmem:[%s7 + $0x70] sm:$0xff]
      %v1531 = vld [vmem:[%s7 + $0x78] sm:$0xff]
      %v1532 = vld [vmem:[%s7 + $0x80] sm:$0xff]
      %v1533 = vld [vmem:[%s7 + $0x88] sm:$0xff]
      %v1534 = vld [vmem:[%s7 + $0x90] sm:$0xff]
      %v1535 = vld [vmem:[%s7 + $0x98] sm:$0xff]
      %v1536 = vld [vmem:[%s7 + $0xa0] sm:$0xff]
      %v1537 = vld [vmem:[%s7 + $0xa8] sm:$0xff]
      %v1538 = vld [vmem:[%s7 + $0xb0] sm:$0xff]
      %v1539 = vld [vmem:[%s7 + $0xb8] sm:$0xff]
      %v1540 = vld [vmem:[%s7 + $0xc0] sm:$0xff]
      %v1541 = vld [vmem:[%s7 + $0xc8] sm:$0xff]
      %v1542 = vld [vmem:[%s7 + $0xd0] sm:$0xff]
      %v1543 = vld [vmem:[%s7 + $0xd8] sm:$0xff]
      %v1544 = vld [vmem:[%s7 + $0xe0] sm:$0xff]
      %v1545 = vld [vmem:[%s7 + $0xe8] sm:$0xff]
      %v1546 = vld [vmem:[%s7 + $0xf0] sm:$0xff]
      %v1547 = vld [vmem:[%s7 + $0xf8] sm:$0xff]
      %v1548 = vld [vmem:[%s7 + $0x100] sm:$0xff]
      %v1549 = vld [vmem:[%s7 + $0x108] sm:$0xff]
      %v1550 = vld [vmem:[%s7 + $0x110] sm:$0xff]
      %v1551 = vld [vmem:[%s7 + $0x118] sm:$0xff]
      %v1552 = vld [vmem:[%s7 + $0x120] sm:$0xff]
      %v1553 = vld [vmem:[%s7 + $0x128] sm:$0xff]
      %v1554 = vld [vmem:[%s7 + $0x130] sm:$0xff]
      %v1555 = vld [vmem:[%s7 + $0x138] sm:$0xff]
      %v1556 = vld [vmem:[%s7 + $0x140] sm:$0xff]
      %v1557 = vld [vmem:[%s7 + $0x148] sm:$0xff]
      %v1558 = vld [vmem:[%s7 + $0x150] sm:$0xff]
      %v1559 = vld [vmem:[%s7 + $0x158] sm:$0xff]
      %v1560 = vld [vmem:[%s7 + $0x160] sm:$0xff]
      %v1561 = vld [vmem:[%s7 + $0x168] sm:$0xff]
      %v1562 = vld [vmem:[%s7 + $0x170] sm:$0xff]
      %v1563 = vld [vmem:[%s7 + $0x178] sm:$0xff]
      %v1564 = vld [vmem:[%s7 + $0x180] sm:$0xff]
      %v1565 = vld [vmem:[%s7 + $0x188] sm:$0xff]
      %v1566 = vld [vmem:[%s7 + $0x190] sm:$0xff]
      %v1567 = vld [vmem:[%s7 + $0x198] sm:$0xff]
      %v1568 = vld [vmem:[%s7 + $0x1a0] sm:$0xff]
      %v1569 = vld [vmem:[%s7 + $0x1a8] sm:$0xff]
      %v1570 = vld [vmem:[%s7 + $0x1b0] sm:$0xff]
      %v1571 = vld [vmem:[%s7 + $0x1b8] sm:$0xff]
      %v1572 = vld [vmem:[%s7 + $0x1c0] sm:$0xff]
      %v1573 = vld [vmem:[%s7 + $0x1c8] sm:$0xff]
      %v1574 = vld [vmem:[%s7 + $0x1d0] sm:$0xff]
      %v1575 = vld [vmem:[%s7 + $0x1d8] sm:$0xff]
      %v1576 = vld [vmem:[%s7 + $0x1e0] sm:$0xff]
      %v1577 = vld [vmem:[%s7 + $0x1e8] sm:$0xff]
      %v1578 = vld [vmem:[%s7 + $0x1f0] sm:$0xff]
      %v1579 = vld [vmem:[%s7 + $0x1f8] sm:$0xff]
      %v1580 = vld [vmem:[%s7 + $0x200] sm:$0xff]
      %v1581 = vld [vmem:[%s7 + $0x208] sm:$0xff]
      %v1582 = vld [vmem:[%s7 + $0x210] sm:$0xff]
      %v1583 = vld [vmem:[%s7 + $0x218] sm:$0xff]
      %v1584 = vld [vmem:[%s7 + $0x220] sm:$0xff]
      %v1585 = vld [vmem:[%s7 + $0x228] sm:$0xff]
      %v1586 = vld [vmem:[%s7 + $0x230] sm:$0xff]
      %v1587 = vld [vmem:[%s7 + $0x238] sm:$0xff]
      %v1588 = vld [vmem:[%s7 + $0x240] sm:$0xff]
      %v1589 = vld [vmem:[%s7 + $0x248] sm:$0xff]
      %v1590 = vld [vmem:[%s7 + $0x250] sm:$0xff]
      %v1591 = vld [vmem:[%s7 + $0x258] sm:$0xff]
      %v1592 = vld [vmem:[%s7 + $0x260] sm:$0xff]
      %v1593 = vld [vmem:[%s7 + $0x268] sm:$0xff]
      %v1594 = vld [vmem:[%s7 + $0x270] sm:$0xff]
      %v1595 = vld [vmem:[%s7 + $0x278] sm:$0xff]
      %v1596 = vld [vmem:[%s7 + $0x280] sm:$0xff]
      %v1597 = vld [vmem:[%s7 + $0x288] sm:$0xff]
      %v1598 = vld [vmem:[%s7 + $0x290] sm:$0xff]
      %v1599 = vld [vmem:[%s7 + $0x298] sm:$0xff]
      %v1600 = vld [vmem:[%s7 + $0x2a0] sm:$0xff]
      %v1601 = vld [vmem:[%s7 + $0x2a8] sm:$0xff]
      %v1602 = vld [vmem:[%s7 + $0x2b0] sm:$0xff]
      %v1603 = vld [vmem:[%s7 + $0x2b8] sm:$0xff]
      %v1604 = vld [vmem:[%s7 + $0x2c0] sm:$0xff]
      %v1605 = vld [vmem:[%s7 + $0x2c8] sm:$0xff]
      %v1606 = vld [vmem:[%s7 + $0x2d0] sm:$0xff]
      %v1607 = vld [vmem:[%s7 + $0x2d8] sm:$0xff]
      %v1608 = vld [vmem:[%s7 + $0x2e0] sm:$0xff]
      %v1609 = vld [vmem:[%s7 + $0x2e8] sm:$0xff]
      %v1610 = vld [vmem:[%s7 + $0x2f0] sm:$0xff]
      %v1611 = vld [vmem:[%s7 + $0x2f8] sm:$0xff]
      %v1612 = vld [vmem:[%s7 + $0x300] sm:$0xff]
      %v1613 = vld [vmem:[%s7 + $0x308] sm:$0xff]
      %v1614 = vld [vmem:[%s7 + $0x310] sm:$0xff]
      %v1615 = vld [vmem:[%s7 + $0x318] sm:$0xff]
      %v1616 = vld [vmem:[%s7 + $0x320] sm:$0xff]
      %v1617 = vld [vmem:[%s7 + $0x328] sm:$0xff]
      %v1618 = vld [vmem:[%s7 + $0x330] sm:$0xff]
      %v1619 = vld [vmem:[%s7 + $0x338] sm:$0xff]
      %v1620 = vld [vmem:[%s7 + $0x340] sm:$0xff]
      %v1621 = vld [vmem:[%s7 + $0x348] sm:$0xff]
      %v1622 = vld [vmem:[%s7 + $0x350] sm:$0xff]
      %v1623 = vld [vmem:[%s7 + $0x358] sm:$0xff]
      %v1624 = vld [vmem:[%s7 + $0x360] sm:$0xff]
      %v1625 = vld [vmem:[%s7 + $0x368] sm:$0xff]
      %v1626 = vld [vmem:[%s7 + $0x370] sm:$0xff]
      %v1627 = vld [vmem:[%s7 + $0x378] sm:$0xff]
      %v1628 = vld [vmem:[%s7 + $0x380] sm:$0xff]
      %v1629 = vld [vmem:[%s7 + $0x388] sm:$0xff]
      %v1630 = vld [vmem:[%s7 + $0x390] sm:$0xff]
      %v1631 = vld [vmem:[%s7 + $0x398] sm:$0xff]
      %v1632 = vld [vmem:[%s7 + $0x3a0] sm:$0xff]
      %v1633 = vld [vmem:[%s7 + $0x3a8] sm:$0xff]
      %v1634 = vld [vmem:[%s7 + $0x3b0] sm:$0xff]
      %v1635 = vld [vmem:[%s7 + $0x3b8] sm:$0xff]
      %v1636 = vld [vmem:[%s7 + $0x3c0] sm:$0xff]
      %v1637 = vld [vmem:[%s7 + $0x3c8] sm:$0xff]
      %v1638 = vld [vmem:[%s7 + $0x3d0] sm:$0xff]
      %v1639 = vld [vmem:[%s7 + $0x3d8] sm:$0xff]
      %v1640 = vld [vmem:[%s7 + $0x3e0] sm:$0xff]
      %v1641 = vld [vmem:[%s7 + $0x3e8] sm:$0xff]
      %v1642 = vld [vmem:[%s7 + $0x3f0] sm:$0xff]
      %v1643 = vld [vmem:[%s7 + $0x3f8] sm:$0xff]
      %1644 = vmatpush.msra.mxu0 %v1546
      %1645 = vmatpush.msra.mxu0 %v1544
      %1646 = vmatpush.msra.mxu0 %v1542
      %1647 = vmatpush.msra.mxu0 %v1540
      %1648 = vmatpush.msra.mxu0 %v1538
      %1649 = vmatpush.msra.mxu0 %v1536
      %1650 = vmatpush.msra.mxu0 %v1534
      %1651 = vmatpush.msra.mxu0 %v1532
      %1652 = vmatpush.msra.mxu0 %v1530
      %1653 = vmatpush.msra.mxu0 %v1528
      %1654 = vmatpush.msra.mxu0 %v1526
      %1655 = vmatpush.msra.mxu0 %v1524
      %1656 = vmatpush.msra.mxu0 %v1522
      %1657 = vmatpush.msra.mxu0 %v1520
      %1658 = vmatpush.msra.mxu0 %v1518
      %1659 = vmatpush.msra.mxu0 %v1516
      %1660 = vmatmul.f32.gmra.mxu0 %v1472
      %v1661 = vpop.f32.mrf.mxu0
      %v1662 = vadd.f32 0.0, %v1661
      %1663 = vdwg.mxu0
      %1664 = vmatpush.msra.mxu0 %v1578
      %1665 = vmatpush.msra.mxu0 %v1576
      %1666 = vmatpush.msra.mxu0 %v1574
      %1667 = vmatpush.msra.mxu0 %v1572
      %1668 = vmatpush.msra.mxu0 %v1570
      %1669 = vmatpush.msra.mxu0 %v1568
      %1670 = vmatpush.msra.mxu0 %v1566
      %1671 = vmatpush.msra.mxu0 %v1564
      %1672 = vmatpush.msra.mxu0 %v1562
      %1673 = vmatpush.msra.mxu0 %v1560
      %1674 = vmatpush.msra.mxu0 %v1558
      %1675 = vmatpush.msra.mxu0 %v1556
      %1676 = vmatpush.msra.mxu0 %v1554
      %1677 = vmatpush.msra.mxu0 %v1552
      %1678 = vmatpush.msra.mxu0 %v1550
      %1679 = vmatpush.msra.mxu0 %v1548
      %1680 = vmatmul.f32.gmra.mxu0 %v1473
      %v1681 = vpop.f32.mrf.mxu0
      %v1682 = vadd.f32 %v1662, %v1681
      %1683 = vdwg.mxu0
      %1684 = vmatpush.msra.mxu0 %v1610
      %1685 = vmatpush.msra.mxu0 %v1608
      %1686 = vmatpush.msra.mxu0 %v1606
      %1687 = vmatpush.msra.mxu0 %v1604
      %1688 = vmatpush.msra.mxu0 %v1602
      %1689 = vmatpush.msra.mxu0 %v1600
      %1690 = vmatpush.msra.mxu0 %v1598
      %1691 = vmatpush.msra.mxu0 %v1596
      %1692 = vmatpush.msra.mxu0 %v1594
      %1693 = vmatpush.msra.mxu0 %v1592
      %1694 = vmatpush.msra.mxu0 %v1590
      %1695 = vmatpush.msra.mxu0 %v1588
      %1696 = vmatpush.msra.mxu0 %v1586
      %1697 = vmatpush.msra.mxu0 %v1584
      %1698 = vmatpush.msra.mxu0 %v1582
      %1699 = vmatpush.msra.mxu0 %v1580
      %1700 = vmatmul.f32.gmra.mxu0 %v1494
      %v1701 = vpop.f32.mrf.mxu0
      %v1702 = vadd.f32 %v1682, %v1701
      %1703 = vdwg.mxu0
      %1704 = vmatpush.msra.mxu0 %v1642
      %1705 = vmatpush.msra.mxu0 %v1640
      %1706 = vmatpush.msra.mxu0 %v1638
      %1707 = vmatpush.msra.mxu0 %v1636
      %1708 = vmatpush.msra.mxu0 %v1634
      %1709 = vmatpush.msra.mxu0 %v1632
      %1710 = vmatpush.msra.mxu0 %v1630
      %1711 = vmatpush.msra.mxu0 %v1628
      %1712 = vmatpush.msra.mxu0 %v1626
      %1713 = vmatpush.msra.mxu0 %v1624
      %1714 = vmatpush.msra.mxu0 %v1622
      %1715 = vmatpush.msra.mxu0 %v1620
      %1716 = vmatpush.msra.mxu0 %v1618
      %1717 = vmatpush.msra.mxu0 %v1616
      %1718 = vmatpush.msra.mxu0 %v1614
      %1719 = vmatpush.msra.mxu0 %v1612
      %1720 = vmatmul.f32.gmra.mxu0 %v1515
      %v1721 = vpop.f32.mrf.mxu0
      %v1722 = vadd.f32 %v1702, %v1721
      %1723 = vdwg.mxu0
      %1724 = vmatpush.msra.mxu0 %v1547
      %1725 = vmatpush.msra.mxu0 %v1545
      %1726 = vmatpush.msra.mxu0 %v1543
      %1727 = vmatpush.msra.mxu0 %v1541
      %1728 = vmatpush.msra.mxu0 %v1539
      %1729 = vmatpush.msra.mxu0 %v1537
      %1730 = vmatpush.msra.mxu0 %v1535
      %1731 = vmatpush.msra.mxu0 %v1533
      %1732 = vmatpush.msra.mxu0 %v1531
      %1733 = vmatpush.msra.mxu0 %v1529
      %1734 = vmatpush.msra.mxu0 %v1527
      %1735 = vmatpush.msra.mxu0 %v1525
      %1736 = vmatpush.msra.mxu0 %v1523
      %1737 = vmatpush.msra.mxu0 %v1521
      %1738 = vmatpush.msra.mxu0 %v1519
      %1739 = vmatpush.msra.mxu0 %v1517
      %1740 = vmatmul.f32.gmra.mxu0 %v1472
      %v1741 = vpop.f32.mrf.mxu0
      %v1742 = vadd.f32 0.0, %v1741
      %1743 = vdwg.mxu0
      %1744 = vmatpush.msra.mxu0 %v1579
      %1745 = vmatpush.msra.mxu0 %v1577
      %1746 = vmatpush.msra.mxu0 %v1575
      %1747 = vmatpush.msra.mxu0 %v1573
      %1748 = vmatpush.msra.mxu0 %v1571
      %1749 = vmatpush.msra.mxu0 %v1569
      %1750 = vmatpush.msra.mxu0 %v1567
      %1751 = vmatpush.msra.mxu0 %v1565
      %1752 = vmatpush.msra.mxu0 %v1563
      %1753 = vmatpush.msra.mxu0 %v1561
      %1754 = vmatpush.msra.mxu0 %v1559
      %1755 = vmatpush.msra.mxu0 %v1557
      %1756 = vmatpush.msra.mxu0 %v1555
      %1757 = vmatpush.msra.mxu0 %v1553
      %1758 = vmatpush.msra.mxu0 %v1551
      %1759 = vmatpush.msra.mxu0 %v1549
      %1760 = vmatmul.f32.gmra.mxu0 %v1473
      %v1761 = vpop.f32.mrf.mxu0
      %v1762 = vadd.f32 %v1742, %v1761
      %1763 = vdwg.mxu0
      %1764 = vmatpush.msra.mxu0 %v1611
      %1765 = vmatpush.msra.mxu0 %v1609
      %1766 = vmatpush.msra.mxu0 %v1607
      %1767 = vmatpush.msra.mxu0 %v1605
      %1768 = vmatpush.msra.mxu0 %v1603
      %1769 = vmatpush.msra.mxu0 %v1601
      %1770 = vmatpush.msra.mxu0 %v1599
      %1771 = vmatpush.msra.mxu0 %v1597
      %1772 = vmatpush.msra.mxu0 %v1595
      %1773 = vmatpush.msra.mxu0 %v1593
      %1774 = vmatpush.msra.mxu0 %v1591
      %1775 = vmatpush.msra.mxu0 %v1589
      %1776 = vmatpush.msra.mxu0 %v1587
      %1777 = vmatpush.msra.mxu0 %v1585
      %1778 = vmatpush.msra.mxu0 %v1583
      %1779 = vmatpush.msra.mxu0 %v1581
      %1780 = vmatmul.f32.gmra.mxu0 %v1494
      %v1781 = vpop.f32.mrf.mxu0
      %v1782 = vadd.f32 %v1762, %v1781
      %1783 = vdwg.mxu0
      %1784 = vmatpush.msra.mxu0 %v1643
      %1785 = vmatpush.msra.mxu0 %v1641
      %1786 = vmatpush.msra.mxu0 %v1639
      %1787 = vmatpush.msra.mxu0 %v1637
      %1788 = vmatpush.msra.mxu0 %v1635
      %1789 = vmatpush.msra.mxu0 %v1633
      %1790 = vmatpush.msra.mxu0 %v1631
      %1791 = vmatpush.msra.mxu0 %v1629
      %1792 = vmatpush.msra.mxu0 %v1627
      %1793 = vmatpush.msra.mxu0 %v1625
      %1794 = vmatpush.msra.mxu0 %v1623
      %1795 = vmatpush.msra.mxu0 %v1621
      %1796 = vmatpush.msra.mxu0 %v1619
      %1797 = vmatpush.msra.mxu0 %v1617
      %1798 = vmatpush.msra.mxu0 %v1615
      %1799 = vmatpush.msra.mxu0 %v1613
      %1800 = vmatmul.f32.gmra.mxu0 %v1515
      %v1801 = vpop.f32.mrf.mxu0
      %v1802 = vadd.f32 %v1782, %v1801
      %1803 = vdwg.mxu0
      %v1804 = vsub.f32 0.0, %v1722
      %v1805 = vsub.f32 0.0, %v1802
      %v1806 = vmul.f32 %v1804, 1.442695
      %v1807 = vpow.pop %v1806
      %v1808 = vmul.f32 %v1805, 1.442695
      %v1809 = vpow.pop %v1808
      %v1810 = vadd.f32 %v1807, 1.0
      %v1811 = vadd.f32 %v1809, 1.0
      %v1812 = vrcp.pop %v1810
      %v1813 = vrcp.pop %v1811
      %v1814 = vld [vmem:[%s305] sm:$0xff]
      %v1815 = vld [vmem:[%s305 + $0x8] sm:$0xff]
      %v1816 = vld [vmem:[%s305 + $0x10] sm:$0xff]
      %v1817 = vld [vmem:[%s305 + $0x18] sm:$0xff]
      %v1818 = vld [vmem:[%s305 + $0x20] sm:$0xff]
      %v1819 = vld [vmem:[%s305 + $0x28] sm:$0xff]
      %v1820 = vld [vmem:[%s305 + $0x30] sm:$0xff]
      %v1821 = vld [vmem:[%s305 + $0x38] sm:$0xff]
      %v1822 = vld [vmem:[%s305 + $0x40] sm:$0xff]
      %v1823 = vld [vmem:[%s305 + $0x48] sm:$0xff]
      %v1824 = vld [vmem:[%s305 + $0x50] sm:$0xff]
      %v1825 = vld [vmem:[%s305 + $0x58] sm:$0xff]
      %v1826 = vld [vmem:[%s305 + $0x60] sm:$0xff]
      %v1827 = vld [vmem:[%s305 + $0x68] sm:$0xff]
      %v1828 = vld [vmem:[%s305 + $0x70] sm:$0xff]
      %v1829 = vld [vmem:[%s305 + $0x78] sm:$0xff]
      %v1830 = vld [vmem:[%s305 + $0x80] sm:$0xff]
      %v1831 = vld [vmem:[%s305 + $0x88] sm:$0xff]
      %v1832 = vld [vmem:[%s305 + $0x90] sm:$0xff]
      %v1833 = vld [vmem:[%s305 + $0x98] sm:$0xff]
      %v1834 = vld [vmem:[%s305 + $0xa0] sm:$0xff]
      %v1835 = vld [vmem:[%s305 + $0xa8] sm:$0xff]
      %v1836 = vld [vmem:[%s305 + $0xb0] sm:$0xff]
      %v1837 = vld [vmem:[%s305 + $0xb8] sm:$0xff]
      %v1838 = vld [vmem:[%s305 + $0xc0] sm:$0xff]
      %v1839 = vld [vmem:[%s305 + $0xc8] sm:$0xff]
      %v1840 = vld [vmem:[%s305 + $0xd0] sm:$0xff]
      %v1841 = vld [vmem:[%s305 + $0xd8] sm:$0xff]
      %v1842 = vld [vmem:[%s305 + $0xe0] sm:$0xff]
      %v1843 = vld [vmem:[%s305 + $0xe8] sm:$0xff]
      %v1844 = vld [vmem:[%s305 + $0xf0] sm:$0xff]
      %v1845 = vld [vmem:[%s305 + $0xf8] sm:$0xff]
      %v1846 = vperm.slane %v1812, 0
      %v1847 = vperm.slane %v1813, 0
      %v1848 = vmul.f32 %v1814, %v1846
      %v1849 = vmul.f32 %v1815, %v1847
      %v1850 = vmul.f32 %v1816, %v1846
      %v1851 = vmul.f32 %v1817, %v1847
      %v1852 = vmul.f32 %v1818, %v1846
      %v1853 = vmul.f32 %v1819, %v1847
      %v1854 = vmul.f32 %v1820, %v1846
      %v1855 = vmul.f32 %v1821, %v1847
      %v1856 = vmul.f32 %v1822, %v1846
      %v1857 = vmul.f32 %v1823, %v1847
      %v1858 = vmul.f32 %v1824, %v1846
      %v1859 = vmul.f32 %v1825, %v1847
      %v1860 = vmul.f32 %v1826, %v1846
      %v1861 = vmul.f32 %v1827, %v1847
      %v1862 = vmul.f32 %v1828, %v1846
      %v1863 = vmul.f32 %v1829, %v1847
      %v1864 = vmul.f32 %v1830, %v1846
      %v1865 = vmul.f32 %v1831, %v1847
      %v1866 = vmul.f32 %v1832, %v1846
      %v1867 = vmul.f32 %v1833, %v1847
      %v1868 = vmul.f32 %v1834, %v1846
      %v1869 = vmul.f32 %v1835, %v1847
      %v1870 = vmul.f32 %v1836, %v1846
      %v1871 = vmul.f32 %v1837, %v1847
      %v1872 = vmul.f32 %v1838, %v1846
      %v1873 = vmul.f32 %v1839, %v1847
      %v1874 = vmul.f32 %v1840, %v1846
      %v1875 = vmul.f32 %v1841, %v1847
      %v1876 = vmul.f32 %v1842, %v1846
      %v1877 = vmul.f32 %v1843, %v1847
      %v1878 = vmul.f32 %v1844, %v1846
      %v1879 = vmul.f32 %v1845, %v1847
      %1880 = vst [vmem:[%s305] sm:$0xff] %v1848
      %1881 = vst [vmem:[%s305 + $0x8] sm:$0xff] %v1849
      %1882 = vst [vmem:[%s305 + $0x10] sm:$0xff] %v1850
      %1883 = vst [vmem:[%s305 + $0x18] sm:$0xff] %v1851
      %1884 = vst [vmem:[%s305 + $0x20] sm:$0xff] %v1852
      %1885 = vst [vmem:[%s305 + $0x28] sm:$0xff] %v1853
      %1886 = vst [vmem:[%s305 + $0x30] sm:$0xff] %v1854
      %1887 = vst [vmem:[%s305 + $0x38] sm:$0xff] %v1855
      %1888 = vst [vmem:[%s305 + $0x40] sm:$0xff] %v1856
      %1889 = vst [vmem:[%s305 + $0x48] sm:$0xff] %v1857
      %1890 = vst [vmem:[%s305 + $0x50] sm:$0xff] %v1858
      %1891 = vst [vmem:[%s305 + $0x58] sm:$0xff] %v1859
      %1892 = vst [vmem:[%s305 + $0x60] sm:$0xff] %v1860
      %1893 = vst [vmem:[%s305 + $0x68] sm:$0xff] %v1861
      %1894 = vst [vmem:[%s305 + $0x70] sm:$0xff] %v1862
      %1895 = vst [vmem:[%s305 + $0x78] sm:$0xff] %v1863
      %1896 = vst [vmem:[%s305 + $0x80] sm:$0xff] %v1864
      %1897 = vst [vmem:[%s305 + $0x88] sm:$0xff] %v1865
      %1898 = vst [vmem:[%s305 + $0x90] sm:$0xff] %v1866
      %1899 = vst [vmem:[%s305 + $0x98] sm:$0xff] %v1867
      %1900 = vst [vmem:[%s305 + $0xa0] sm:$0xff] %v1868
      %1901 = vst [vmem:[%s305 + $0xa8] sm:$0xff] %v1869
      %1902 = vst [vmem:[%s305 + $0xb0] sm:$0xff] %v1870
      %1903 = vst [vmem:[%s305 + $0xb8] sm:$0xff] %v1871
      %1904 = vst [vmem:[%s305 + $0xc0] sm:$0xff] %v1872
      %1905 = vst [vmem:[%s305 + $0xc8] sm:$0xff] %v1873
      %1906 = vst [vmem:[%s305 + $0xd0] sm:$0xff] %v1874
      %1907 = vst [vmem:[%s305 + $0xd8] sm:$0xff] %v1875
      %1908 = vst [vmem:[%s305 + $0xe0] sm:$0xff] %v1876
      %1909 = vst [vmem:[%s305 + $0xe8] sm:$0xff] %v1877
      %1910 = vst [vmem:[%s305 + $0xf0] sm:$0xff] %v1878
      %1911 = vst [vmem:[%s305 + $0xf8] sm:$0xff] %v1879
      %p1912 = scmp.lt.s32.totalorder %s19, 1
      %s1913 = scalar_select %p1912, %s19, 1
      %s1914 = smul.addr %s1913, 32
      %s1915 = smul.addr %s1914, 8
      %s1916 = scalar_lea.vmem %s8, %s1915
      // Predicated region
      $region53: #{cbam_forward.1} parent=51 // pred_check
        %p1917 = pneg %p210
      $region54: #{cbam_forward.1} parent=51 // pred_check_branch
        %1919 = sbr.rel (%p1917) target = $region56
      $region55: #{cbam_forward.1} parent=51 // pred_region
        _
      $region56: #{cbam_forward.1} parent=51 // pred_fallthru
        _
    $region52: #{cbam_forward.1} parent=5 // pred_fallthru
      _
    %p1920 = scmp.le.s32.totalorder 2, %s14
    // Predicated region
    $region57: #{cbam_forward.1} parent=5 // pred_check
      %p1921 = pneg %p1920
    $region58: #{cbam_forward.1} parent=5 // pred_check_branch
      %1923 = sbr.rel (%p1921) target = $region60
    $region59: #{cbam_forward.1} parent=5 // pred_region
      %s1924 = ssub.s32 %s14, 2
      // Predicated region
      $region61: #{cbam_forward.1} parent=59 // pred_check
        %p1925 = pneg %p216
      $region62: #{cbam_forward.1} parent=59 // pred_check_branch
        %1927 = sbr.rel (%p1925) target = $region64
      $region63: #{cbam_forward.1} parent=59 // pred_region
        %p1928 = scmp.lt.s32.totalorder %s20, 1
        %s1929 = scalar_select %p1928, %s20, 1
        %s1930 = smul.addr %s1929, 32
        %s1931 = smul.addr %s1930, 8
        %s1932 = scalar_lea.vmem %s8, %s1931
      $region64: #{cbam_forward.1} parent=59 // pred_fallthru
        _
    $region60: #{cbam_forward.1} parent=5 // pred_fallthru
      _
  $region6: #{cbam_forward.1} parent=0 // loop_footer
    %s18 = sadd.s32 1, %s14
  $region7: #{cbam_forward.1} parent=0 // loop_footer_branch
    %13 = sbr.rel target = $region3
  $region8: #{cbam_forward.1} parent=0 // loop_exit
    _

</llo_original>
